<compile_context>
chip_gen: v6e
topology: v6e:2x2x1
jax: 0.10.0
libtpu: 0.0.40
codegen_flags: <defaults>
</compile_context>

<pallas_src>
import functools

import jax
import jax.numpy as jnp
from jax import lax
from jax.experimental import pallas as pl
from jax.experimental.pallas import tpu as pltpu


def _round_up(x, m):
    return ((x + m - 1) // m) * m


# ---------------------------------------------------------------------------
# Pallas kernel: sigmoid*sigmoid activation + box decode, K (all levels) on lanes
# ---------------------------------------------------------------------------
def _yolox_post_kernel(n_chunks, chunk,
                       cls_ref, loc_ref, obj_ref, aux_ref,
                       cls_out_ref, loc_out_ref):
    # Block shapes (channels on sublanes, fused/flattened pixel tile on lanes):
    #   cls_ref (1, Ccls, TK)   loc_ref (1, 4, TK)   obj_ref (1, 1, TK)
    #   aux_ref (1, 3, TK) = [anchor_x, anchor_y, stride], f32, batch-invariant
    def body(c, carry):
        off = pl.multiple_of(c * chunk, chunk)       # chunk is a multiple of 128
        sl = pl.ds(off, chunk)

        # cls_pred = sigmoid(cls) * sigmoid(obj), obj broadcast over class rows.
        # Stays in the native dtype (bf16 math is fine on v6e/v7x; f32 otherwise).
        cls = cls_ref[:, :, sl]
        obj = obj_ref[:, :, sl]
        cls_out_ref[:, :, sl] = (jax.nn.sigmoid(cls) * jax.nn.sigmoid(obj)
                                 ).astype(cls_out_ref.dtype)

        # Box decode in f32. Static per-channel sublane slices, direct stores
        # (no concatenate temporary).
        loc = loc_ref[:, :, sl].astype(jnp.float32)
        aux = aux_ref[:, :, sl]
        stride = aux[:, 2:3, :]                       # broadcasts over sublanes
        xy = loc[:, 0:2, :] * stride + aux[:, 0:2, :]
        wh = jnp.exp(loc[:, 2:4, :]) * stride         # norm_on_bbox=False branch
        loc_out_ref[:, 0:2, sl] = xy.astype(loc_out_ref.dtype)
        loc_out_ref[:, 2:4, sl] = wh.astype(loc_out_ref.dtype)
        return carry

    lax.fori_loop(0, n_chunks, body, 0, unroll=True)


# ---------------------------------------------------------------------------
# Wrapper: single fused pallas_call across all FPN levels
# ---------------------------------------------------------------------------
def yolox_post_fused(mlvl_cls, mlvl_loc, mlvl_obj, strides, *,
                     max_tk=8192, chunk_target=1024, interpret=False):
    """Fused activation + box decode for all FPN levels in one launch.

    Inputs per level are NCHW.  Returns per-level channel-first outputs:
      cls_act list of (B, Ccls, H*W)  [input dtype]
      loc_dec list of (B, 4, H*W)     [float32]
    """
    B, Ccls = mlvl_cls[0].shape[0], mlvl_cls[0].shape[1]
    shapes = [(p.shape[2], p.shape[3]) for p in mlvl_cls]
    hws = [h * w for h, w in shapes]
    hw_pads = [_round_up(hw, 128) for hw in hws]
    total0 = sum(hw_pads)

    # Lane tiling: big tiles, >= 2 grid steps when B == 1 (both v7x TCs), and
    # nt * tk covers the padded total exactly -> no masked remainder stores.
    min_tiles = 2 if B == 1 else 1
    nt = max(pl.cdiv(total0, max_tk), min_tiles)
    tk = _round_up(pl.cdiv(total0, nt), 128)
    total = nt * tk
    chunk = next(c for c in (chunk_target, 512, 256, 128) if tk % c == 0)
    n_chunks = tk // chunk

    def cat(levels, C):
        parts = []
        for p, hw, hw_pad in zip(levels, hws, hw_pads):
            x = p.reshape(B, C, hw)                        # pure reshape (NCHW)
            parts.append(jnp.pad(x, ((0, 0), (0, 0), (0, hw_pad - hw))))
        out = jnp.concatenate(parts, axis=-1)
        return jnp.pad(out, ((0, 0), (0, 0), (0, total - total0)))

    cls_cat = cat(mlvl_cls, Ccls)
    loc_cat = cat(mlvl_loc, 4)
    obj_cat = cat(mlvl_obj, 1)

    # Batch-invariant aux stream: per-lane [anchor_x, anchor_y, stride].
    # YOLOX grid corners (x*stride, y*stride), h-major to match permute(0,2,3,1).
    aux_parts = []
    for (h, w), s, hw_pad in zip(shapes, strides, hw_pads):
        ys, xs = jnp.meshgrid(jnp.arange(h, dtype=jnp.float32),
                              jnp.arange(w, dtype=jnp.float32), indexing="ij")
        ax = xs.reshape(-1) * float(s)
        ay = ys.reshape(-1) * float(s)
        st = jnp.full((h * w,), float(s), jnp.float32)
        aux_l = jnp.stack([ax, ay, st], axis=0)            # (3, hw)
        aux_parts.append(jnp.pad(aux_l, ((0, 0), (0, hw_pad - h * w))))
    aux = jnp.concatenate(aux_parts, axis=-1)
    aux = jnp.pad(aux, ((0, 0), (0, total - total0)))[None]   # (1, 3, total)

    kernel = functools.partial(_yolox_post_kernel, n_chunks, chunk)
    cls_out, loc_out = pl.pallas_call(
        kernel,
        out_shape=(
            jax.ShapeDtypeStruct((B, Ccls, total), cls_cat.dtype),
            jax.ShapeDtypeStruct((B, 4, total), jnp.float32),
        ),
        grid_spec=pltpu.PrefetchScalarGridSpec(
            num_scalar_prefetch=0,
            grid=(B, nt),
            in_specs=[
                pl.BlockSpec((1, Ccls, tk), lambda b, t: (b, 0, t)),
                pl.BlockSpec((1, 4, tk), lambda b, t: (b, 0, t)),
                pl.BlockSpec((1, 1, tk), lambda b, t: (b, 0, t)),
                pl.BlockSpec((1, 3, tk), lambda b, t: (0, 0, t)),   # aux
            ],
            out_specs=[
                pl.BlockSpec((1, Ccls, tk), lambda b, t: (b, 0, t)),
                pl.BlockSpec((1, 4, tk), lambda b, t: (b, 0, t)),
            ],
        ),
        compiler_params=pltpu.CompilerParams(
            dimension_semantics=("parallel", "parallel"),
            vmem_limit_bytes=32 * 1024 * 1024,
        ),
        interpret=interpret,
    )(cls_cat, loc_cat, obj_cat, aux)

    # Slice back per level (channel-first; no [B,K,C] transpose on the hot path).
    cls_lvl, loc_lvl, off = [], [], 0
    for hw, hw_pad in zip(hws, hw_pads):
        cls_lvl.append(cls_out[:, :, off:off + hw])
        loc_lvl.append(loc_out[:, :, off:off + hw])
        off += hw_pad
    return cls_lvl, loc_lvl


# ---------------------------------------------------------------------------
# Glue: eval-mode forward (up to, but excluding, predictor.predict)
# ---------------------------------------------------------------------------
def yolox_post_w_id_forward(mlvl_preds_nchw, strides, *, max_tk=8192):
    """Returns per-level (cls_act, loc_dec, id, obj) in channel-first (B, C, K)
    layout; use to_module_layout() if the [B, K, C] module layout is required."""
    mlvl_cls = [p[0] for p in mlvl_preds_nchw]
    mlvl_loc = [p[1] for p in mlvl_preds_nchw]
    mlvl_obj = [p[3] for p in mlvl_preds_nchw]
    cls_lvl, loc_lvl = yolox_post_fused(mlvl_cls, mlvl_loc, mlvl_obj, strides,
                                        max_tk=max_tk)
    outs = []
    for (cls_p, loc_p, id_p, obj_p), cls_cf, loc_cf in zip(
            mlvl_preds_nchw, cls_lvl, loc_lvl):
        b, ci, h, w = id_p.shape
        id_cf = id_p.reshape(b, ci, h * w)      # pure reshape, no HBM copy
        obj_cf = obj_p.reshape(b, 1, h * w)
        outs.append((cls_cf, loc_cf, id_cf, obj_cf))
    # TODO(synk): predictor.predict (score thresholding + NMS + id-feature
    # gathering) is an external ROI predictor with data-dependent output
    # sizes; not implemented as a Pallas kernel.
    return outs


def to_module_layout(level_out):
    """Convert one level's channel-first tuple to the module's [B, K, C] layout.
    (Costs a full HBM round-trip per tensor; only use if the consumer needs it.)"""
    return tuple(jnp.transpose(t, (0, 2, 1)) for t in level_out)


# ---------------------------------------------------------------------------
# Pure-JAX reference for correctness check
# ---------------------------------------------------------------------------
def permute_pred(p, dense_points=1):
    """[B, A*C, H, W] -> [B, H*W*A, C] (matches permute(0,2,3,1).view(b,k,-1))."""
    b, ac, h, w = p.shape
    k = dense_points * h * w
    return jnp.transpose(p, (0, 2, 3, 1)).reshape(b, k, -1)


def make_anchor_points(h, w, stride):
    ys, xs = jnp.meshgrid(jnp.arange(h, dtype=jnp.float32),
                          jnp.arange(w, dtype=jnp.float32), indexing="ij")
    return jnp.stack([xs.reshape(-1), ys.reshape(-1)], axis=-1) * float(stride)


def _reference(mlvl_preds_nchw, strides):
    outs = []
    for (cls_p, loc_p, id_p, obj_p), s in zip(mlvl_preds_nchw, strides):
        b, _, h, w = cls_p.shape
        cls_k = permute_pred(cls_p)
        loc_k = permute_pred(loc_p)
        obj_k = permute_pred(obj_p)
        pts = make_anchor_points(h, w, s)
        xy = loc_k[..., :2] * s + pts[None]
        wh = jnp.exp(loc_k[..., 2:4]) * s
        loc_dec = jnp.concatenate([xy, wh], axis=-1)
        cls_act = jax.nn.sigmoid(cls_k) * jax.nn.sigmoid(obj_k)
        outs.append((cls_act, loc_dec))
    return outs


if __name__ == "__main__":
    key = jax.random.PRNGKey(0)
    B = 2
    num_classes = 5          # cls head outputs num_classes - 1 = 4 channels
    num_ids = 8
    # small but representative FPN pyramid
    level_shapes = [(40, 40), (20, 20), (10, 10)]
    strides = [8, 16, 32]

    mlvl_preds = []
    for (h, w) in level_shapes:
        key, k1, k2, k3, k4 = jax.random.split(key, 5)
        cls_p = jax.random.normal(k1, (B, num_classes - 1, h, w), jnp.float32)
        loc_p = jax.random.normal(k2, (B, 4, h, w), jnp.float32)
        id_p = jax.random.normal(k3, (B, num_ids, h, w), jnp.float32)
        obj_p = jax.random.normal(k4, (B, 1, h, w), jnp.float32)
        mlvl_preds.append((cls_p, loc_p, id_p, obj_p))

    refs = _reference(mlvl_preds, strides)

    ok = True
    # single-tile (big tk) and multi-tile lane grids
    for max_tk in (8192, 512):
        outs = jax.block_until_ready(
            yolox_post_w_id_forward(mlvl_preds, strides, max_tk=max_tk))
        for (cls_cf, loc_cf, _, _), (cls_ref, loc_ref) in zip(outs, refs):
            cls_k = jnp.transpose(cls_cf, (0, 2, 1))   # test-only layout convert
            loc_k = jnp.transpose(loc_cf, (0, 2, 1))
            ok &= bool(jnp.allclose(cls_k, cls_ref, atol=1e-5, rtol=1e-5))
            ok &= bool(jnp.allclose(loc_k, loc_ref, atol=1e-4, rtol=1e-4))

    # B == 1 path (forces >= 2 lane tiles so both v7x TensorCores get work)
    mlvl_preds_b1 = [tuple(p[:1] for p in lvl) for lvl in mlvl_preds]
    refs_b1 = _reference(mlvl_preds_b1, strides)
    outs_b1 = jax.block_until_ready(
        yolox_post_w_id_forward(mlvl_preds_b1, strides))
    for (cls_cf, loc_cf, _, _), (cls_ref, loc_ref) in zip(outs_b1, refs_b1):
        ok &= bool(jnp.allclose(jnp.transpose(cls_cf, (0, 2, 1)), cls_ref,
                                atol=1e-5, rtol=1e-5))
        ok &= bool(jnp.allclose(jnp.transpose(loc_cf, (0, 2, 1)), loc_ref,
                                atol=1e-4, rtol=1e-4))

    assert ok
    print("KERNEL_OK")
</pallas_src>

<mosaic_0001>
module attributes {stable_mosaic.version = 11 : i64} {
  func.func @_yolox_post_kernel(%arg0: i32, %arg1: i32, %arg2: memref<1x4x2304xf32, #tpu.memory_space<vmem>>, %arg3: memref<1x4x2304xf32, #tpu.memory_space<vmem>>, %arg4: memref<1x1x2304xf32, #tpu.memory_space<vmem>>, %arg5: memref<1x3x2304xf32, #tpu.memory_space<vmem>>, %arg6: memref<1x4x2304xf32, #tpu.memory_space<vmem>>, %arg7: memref<1x4x2304xf32, #tpu.memory_space<vmem>>) attributes {dimension_semantics = [#tpu.dimension_semantics<parallel>, #tpu.dimension_semantics<parallel>], iteration_bounds = array<i64: 2, 1>, scalar_prefetch = 0 : i64, scratch_operands = 0 : i64, tpu.core_type = #tpu.core_type<tc>, window_params = [{transform_indices = @transform_0, window_bounds = array<i64: 1, 4, 2304>}, {transform_indices = @transform_1, window_bounds = array<i64: 1, 4, 2304>}, {transform_indices = @transform_2, window_bounds = array<i64: 1, 1, 2304>}, {transform_indices = @transform_3, window_bounds = array<i64: 1, 3, 2304>}, {transform_indices = @transform_4, window_bounds = array<i64: 1, 4, 2304>}, {transform_indices = @transform_5, window_bounds = array<i64: 1, 4, 2304>}]} {
    %c0_i32 = arith.constant 0 : i32
    %c256_i32 = arith.constant 256 : i32
    %0 = arith.muli %c0_i32, %c256_i32 : i32
    %1 = tpu.assume_multiple %0, 256 : i32
    %c0 = arith.constant 0 : index
    %c0_0 = arith.constant 0 : index
    %2 = arith.index_cast %1 : i32 to index
    %3 = vector.load %arg2[%c0, %c0_0, %2] : memref<1x4x2304xf32, #tpu.memory_space<vmem>>, vector<1x4x256xf32>
    %c0_1 = arith.constant 0 : index
    %c0_2 = arith.constant 0 : index
    %4 = arith.index_cast %1 : i32 to index
    %5 = vector.load %arg4[%c0_1, %c0_2, %4] : memref<1x1x2304xf32, #tpu.memory_space<vmem>>, vector<1x1x256xf32>
    %6 = arith.negf %3 : vector<1x4x256xf32>
    %7 = math.exp %6 : vector<1x4x256xf32>
    %cst = arith.constant 1.000000e+00 : f32
    %8 = vector.broadcast %cst : f32 to vector<1x4x256xf32>
    %9 = arith.addf %8, %7 : vector<1x4x256xf32>
    %10 = arith.divf %8, %9 : vector<1x4x256xf32>
    %11 = arith.negf %5 : vector<1x1x256xf32>
    %12 = math.exp %11 : vector<1x1x256xf32>
    %cst_3 = arith.constant 1.000000e+00 : f32
    %13 = vector.broadcast %cst_3 : f32 to vector<1x1x256xf32>
    %14 = arith.addf %13, %12 : vector<1x1x256xf32>
    %15 = arith.divf %13, %14 : vector<1x1x256xf32>
    %16 = vector.broadcast %15 : vector<1x1x256xf32> to vector<1x4x256xf32>
    %17 = arith.mulf %10, %16 : vector<1x4x256xf32>
    %c0_4 = arith.constant 0 : index
    %c0_5 = arith.constant 0 : index
    %18 = arith.index_cast %1 : i32 to index
    %19 = vector.load %arg6[%c0_4, %c0_5, %18] : memref<1x4x2304xf32, #tpu.memory_space<vmem>>, vector<1x4x256xf32>
    tpu.vector_store %arg6[%c0_4, %c0_5, %18], %17 {strides = array<i32>} : memref<1x4x2304xf32, #tpu.memory_space<vmem>>, vector<1x4x256xf32>,
    %c0_6 = arith.constant 0 : index
    %c0_7 = arith.constant 0 : index
    %20 = arith.index_cast %1 : i32 to index
    %21 = vector.load %arg3[%c0_6, %c0_7, %20] : memref<1x4x2304xf32, #tpu.memory_space<vmem>>, vector<1x4x256xf32>
    %c0_8 = arith.constant 0 : index
    %c0_9 = arith.constant 0 : index
    %22 = arith.index_cast %1 : i32 to index
    %23 = vector.load %arg5[%c0_8, %c0_9, %22] : memref<1x3x2304xf32, #tpu.memory_space<vmem>>, vector<1x3x256xf32>
    %24 = vector.extract_strided_slice %23 {offsets = [0, 2, 0], sizes = [1, 1, 256], strides = [1, 1, 1]} : vector<1x3x256xf32> to vector<1x1x256xf32>
    %25 = vector.extract_strided_slice %21 {offsets = [0, 0, 0], sizes = [1, 2, 256], strides = [1, 1, 1]} : vector<1x4x256xf32> to vector<1x2x256xf32>
    %26 = vector.broadcast %24 : vector<1x1x256xf32> to vector<1x2x256xf32>
    %27 = arith.mulf %25, %26 : vector<1x2x256xf32>
    %28 = vector.extract_strided_slice %23 {offsets = [0, 0, 0], sizes = [1, 2, 256], strides = [1, 1, 1]} : vector<1x3x256xf32> to vector<1x2x256xf32>
    %29 = arith.addf %27, %28 : vector<1x2x256xf32>
    %30 = vector.extract_strided_slice %21 {offsets = [0, 2, 0], sizes = [1, 2, 256], strides = [1, 1, 1]} : vector<1x4x256xf32> to vector<1x2x256xf32>
    %31 = math.exp %30 : vector<1x2x256xf32>
    %32 = vector.broadcast %24 : vector<1x1x256xf32> to vector<1x2x256xf32>
    %33 = arith.mulf %31, %32 : vector<1x2x256xf32>
    %c0_10 = arith.constant 0 : index
    %c0_11 = arith.constant 0 : index
    %34 = arith.index_cast %1 : i32 to index
    %35 = vector.load %arg7[%c0_10, %c0_11, %34] : memref<1x4x2304xf32, #tpu.memory_space<vmem>>, vector<1x2x256xf32>
    tpu.vector_store %arg7[%c0_10, %c0_11, %34], %29 {strides = array<i32>} : memref<1x4x2304xf32, #tpu.memory_space<vmem>>, vector<1x2x256xf32>,
    %c0_12 = arith.constant 0 : index
    %c2 = arith.constant 2 : index
    %36 = arith.index_cast %1 : i32 to index
    %37 = vector.load %arg7[%c0_12, %c2, %36] : memref<1x4x2304xf32, #tpu.memory_space<vmem>>, vector<1x2x256xf32>
    tpu.vector_store %arg7[%c0_12, %c2, %36], %33 {strides = array<i32>} : memref<1x4x2304xf32, #tpu.memory_space<vmem>>, vector<1x2x256xf32>,
    %c1_i32 = arith.constant 1 : i32
    %c256_i32_13 = arith.constant 256 : i32
    %38 = arith.muli %c1_i32, %c256_i32_13 : i32
    %39 = tpu.assume_multiple %38, 256 : i32
    %c0_14 = arith.constant 0 : index
    %c0_15 = arith.constant 0 : index
    %40 = arith.index_cast %39 : i32 to index
    %41 = vector.load %arg2[%c0_14, %c0_15, %40] : memref<1x4x2304xf32, #tpu.memory_space<vmem>>, vector<1x4x256xf32>
    %c0_16 = arith.constant 0 : index
    %c0_17 = arith.constant 0 : index
    %42 = arith.index_cast %39 : i32 to index
    %43 = vector.load %arg4[%c0_16, %c0_17, %42] : memref<1x1x2304xf32, #tpu.memory_space<vmem>>, vector<1x1x256xf32>
    %44 = arith.negf %41 : vector<1x4x256xf32>
    %45 = math.exp %44 : vector<1x4x256xf32>
    %cst_18 = arith.constant 1.000000e+00 : f32
    %46 = vector.broadcast %cst_18 : f32 to vector<1x4x256xf32>
    %47 = arith.addf %46, %45 : vector<1x4x256xf32>
    %48 = arith.divf %46, %47 : vector<1x4x256xf32>
    %49 = arith.negf %43 : vector<1x1x256xf32>
    %50 = math.exp %49 : vector<1x1x256xf32>
    %cst_19 = arith.constant 1.000000e+00 : f32
    %51 = vector.broadcast %cst_19 : f32 to vector<1x1x256xf32>
    %52 = arith.addf %51, %50 : vector<1x1x256xf32>
    %53 = arith.divf %51, %52 : vector<1x1x256xf32>
    %54 = vector.broadcast %53 : vector<1x1x256xf32> to vector<1x4x256xf32>
    %55 = arith.mulf %48, %54 : vector<1x4x256xf32>
    %c0_20 = arith.constant 0 : index
    %c0_21 = arith.constant 0 : index
    %56 = arith.index_cast %39 : i32 to index
    %57 = vector.load %arg6[%c0_20, %c0_21, %56] : memref<1x4x2304xf32, #tpu.memory_space<vmem>>, vector<1x4x256xf32>
    tpu.vector_store %arg6[%c0_20, %c0_21, %56], %55 {strides = array<i32>} : memref<1x4x2304xf32, #tpu.memory_space<vmem>>, vector<1x4x256xf32>,
    %c0_22 = arith.constant 0 : index
    %c0_23 = arith.constant 0 : index
    %58 = arith.index_cast %39 : i32 to index
    %59 = vector.load %arg3[%c0_22, %c0_23, %58] : memref<1x4x2304xf32, #tpu.memory_space<vmem>>, vector<1x4x256xf32>
    %c0_24 = arith.constant 0 : index
    %c0_25 = arith.constant 0 : index
    %60 = arith.index_cast %39 : i32 to index
    %61 = vector.load %arg5[%c0_24, %c0_25, %60] : memref<1x3x2304xf32, #tpu.memory_space<vmem>>, vector<1x3x256xf32>
    %62 = vector.extract_strided_slice %61 {offsets = [0, 2, 0], sizes = [1, 1, 256], strides = [1, 1, 1]} : vector<1x3x256xf32> to vector<1x1x256xf32>
    %63 = vector.extract_strided_slice %59 {offsets = [0, 0, 0], sizes = [1, 2, 256], strides = [1, 1, 1]} : vector<1x4x256xf32> to vector<1x2x256xf32>
    %64 = vector.broadcast %62 : vector<1x1x256xf32> to vector<1x2x256xf32>
    %65 = arith.mulf %63, %64 : vector<1x2x256xf32>
    %66 = vector.extract_strided_slice %61 {offsets = [0, 0, 0], sizes = [1, 2, 256], strides = [1, 1, 1]} : vector<1x3x256xf32> to vector<1x2x256xf32>
    %67 = arith.addf %65, %66 : vector<1x2x256xf32>
    %68 = vector.extract_strided_slice %59 {offsets = [0, 2, 0], sizes = [1, 2, 256], strides = [1, 1, 1]} : vector<1x4x256xf32> to vector<1x2x256xf32>
    %69 = math.exp %68 : vector<1x2x256xf32>
    %70 = vector.broadcast %62 : vector<1x1x256xf32> to vector<1x2x256xf32>
    %71 = arith.mulf %69, %70 : vector<1x2x256xf32>
    %c0_26 = arith.constant 0 : index
    %c0_27 = arith.constant 0 : index
    %72 = arith.index_cast %39 : i32 to index
    %73 = vector.load %arg7[%c0_26, %c0_27, %72] : memref<1x4x2304xf32, #tpu.memory_space<vmem>>, vector<1x2x256xf32>
    tpu.vector_store %arg7[%c0_26, %c0_27, %72], %67 {strides = array<i32>} : memref<1x4x2304xf32, #tpu.memory_space<vmem>>, vector<1x2x256xf32>,
    %c0_28 = arith.constant 0 : index
    %c2_29 = arith.constant 2 : index
    %74 = arith.index_cast %39 : i32 to index
    %75 = vector.load %arg7[%c0_28, %c2_29, %74] : memref<1x4x2304xf32, #tpu.memory_space<vmem>>, vector<1x2x256xf32>
    tpu.vector_store %arg7[%c0_28, %c2_29, %74], %71 {strides = array<i32>} : memref<1x4x2304xf32, #tpu.memory_space<vmem>>, vector<1x2x256xf32>,
    %c2_i32 = arith.constant 2 : i32
    %c256_i32_30 = arith.constant 256 : i32
    %76 = arith.muli %c2_i32, %c256_i32_30 : i32
    %77 = tpu.assume_multiple %76, 256 : i32
    %c0_31 = arith.constant 0 : index
    %c0_32 = arith.constant 0 : index
    %78 = arith.index_cast %77 : i32 to index
    %79 = vector.load %arg2[%c0_31, %c0_32, %78] : memref<1x4x2304xf32, #tpu.memory_space<vmem>>, vector<1x4x256xf32>
    %c0_33 = arith.constant 0 : index
    %c0_34 = arith.constant 0 : index
    %80 = arith.index_cast %77 : i32 to index
    %81 = vector.load %arg4[%c0_33, %c0_34, %80] : memref<1x1x2304xf32, #tpu.memory_space<vmem>>, vector<1x1x256xf32>
    %82 = arith.negf %79 : vector<1x4x256xf32>
    %83 = math.exp %82 : vector<1x4x256xf32>
    %cst_35 = arith.constant 1.000000e+00 : f32
    %84 = vector.broadcast %cst_35 : f32 to vector<1x4x256xf32>
    %85 = arith.addf %84, %83 : vector<1x4x256xf32>
    %86 = arith.divf %84, %85 : vector<1x4x256xf32>
    %87 = arith.negf %81 : vector<1x1x256xf32>
    %88 = math.exp %87 : vector<1x1x256xf32>
    %cst_36 = arith.constant 1.000000e+00 : f32
    %89 = vector.broadcast %cst_36 : f32 to vector<1x1x256xf32>
    %90 = arith.addf %89, %88 : vector<1x1x256xf32>
    %91 = arith.divf %89, %90 : vector<1x1x256xf32>
    %92 = vector.broadcast %91 : vector<1x1x256xf32> to vector<1x4x256xf32>
    %93 = arith.mulf %86, %92 : vector<1x4x256xf32>
    %c0_37 = arith.constant 0 : index
    %c0_38 = arith.constant 0 : index
    %94 = arith.index_cast %77 : i32 to index
    %95 = vector.load %arg6[%c0_37, %c0_38, %94] : memref<1x4x2304xf32, #tpu.memory_space<vmem>>, vector<1x4x256xf32>
    tpu.vector_store %arg6[%c0_37, %c0_38, %94], %93 {strides = array<i32>} : memref<1x4x2304xf32, #tpu.memory_space<vmem>>, vector<1x4x256xf32>,
    %c0_39 = arith.constant 0 : index
    %c0_40 = arith.constant 0 : index
    %96 = arith.index_cast %77 : i32 to index
    %97 = vector.load %arg3[%c0_39, %c0_40, %96] : memref<1x4x2304xf32, #tpu.memory_space<vmem>>, vector<1x4x256xf32>
    %c0_41 = arith.constant 0 : index
    %c0_42 = arith.constant 0 : index
    %98 = arith.index_cast %77 : i32 to index
    %99 = vector.load %arg5[%c0_41, %c0_42, %98] : memref<1x3x2304xf32, #tpu.memory_space<vmem>>, vector<1x3x256xf32>
    %100 = vector.extract_strided_slice %99 {offsets = [0, 2, 0], sizes = [1, 1, 256], strides = [1, 1, 1]} : vector<1x3x256xf32> to vector<1x1x256xf32>
    %101 = vector.extract_strided_slice %97 {offsets = [0, 0, 0], sizes = [1, 2, 256], strides = [1, 1, 1]} : vector<1x4x256xf32> to vector<1x2x256xf32>
    %102 = vector.broadcast %100 : vector<1x1x256xf32> to vector<1x2x256xf32>
    %103 = arith.mulf %101, %102 : vector<1x2x256xf32>
    %104 = vector.extract_strided_slice %99 {offsets = [0, 0, 0], sizes = [1, 2, 256], strides = [1, 1, 1]} : vector<1x3x256xf32> to vector<1x2x256xf32>
    %105 = arith.addf %103, %104 : vector<1x2x256xf32>
    %106 = vector.extract_strided_slice %97 {offsets = [0, 2, 0], sizes = [1, 2, 256], strides = [1, 1, 1]} : vector<1x4x256xf32> to vector<1x2x256xf32>
    %107 = math.exp %106 : vector<1x2x256xf32>
    %108 = vector.broadcast %100 : vector<1x1x256xf32> to vector<1x2x256xf32>
    %109 = arith.mulf %107, %108 : vector<1x2x256xf32>
    %c0_43 = arith.constant 0 : index
    %c0_44 = arith.constant 0 : index
    %110 = arith.index_cast %77 : i32 to index
    %111 = vector.load %arg7[%c0_43, %c0_44, %110] : memref<1x4x2304xf32, #tpu.memory_space<vmem>>, vector<1x2x256xf32>
    tpu.vector_store %arg7[%c0_43, %c0_44, %110], %105 {strides = array<i32>} : memref<1x4x2304xf32, #tpu.memory_space<vmem>>, vector<1x2x256xf32>,
    %c0_45 = arith.constant 0 : index
    %c2_46 = arith.constant 2 : index
    %112 = arith.index_cast %77 : i32 to index
    %113 = vector.load %arg7[%c0_45, %c2_46, %112] : memref<1x4x2304xf32, #tpu.memory_space<vmem>>, vector<1x2x256xf32>
    tpu.vector_store %arg7[%c0_45, %c2_46, %112], %109 {strides = array<i32>} : memref<1x4x2304xf32, #tpu.memory_space<vmem>>, vector<1x2x256xf32>,
    %c3_i32 = arith.constant 3 : i32
    %c256_i32_47 = arith.constant 256 : i32
    %114 = arith.muli %c3_i32, %c256_i32_47 : i32
    %115 = tpu.assume_multiple %114, 256 : i32
    %c0_48 = arith.constant 0 : index
    %c0_49 = arith.constant 0 : index
    %116 = arith.index_cast %115 : i32 to index
    %117 = vector.load %arg2[%c0_48, %c0_49, %116] : memref<1x4x2304xf32, #tpu.memory_space<vmem>>, vector<1x4x256xf32>
    %c0_50 = arith.constant 0 : index
    %c0_51 = arith.constant 0 : index
    %118 = arith.index_cast %115 : i32 to index
    %119 = vector.load %arg4[%c0_50, %c0_51, %118] : memref<1x1x2304xf32, #tpu.memory_space<vmem>>, vector<1x1x256xf32>
    %120 = arith.negf %117 : vector<1x4x256xf32>
    %121 = math.exp %120 : vector<1x4x256xf32>
    %cst_52 = arith.constant 1.000000e+00 : f32
    %122 = vector.broadcast %cst_52 : f32 to vector<1x4x256xf32>
    %123 = arith.addf %122, %121 : vector<1x4x256xf32>
    %124 = arith.divf %122, %123 : vector<1x4x256xf32>
    %125 = arith.negf %119 : vector<1x1x256xf32>
    %126 = math.exp %125 : vector<1x1x256xf32>
    %cst_53 = arith.constant 1.000000e+00 : f32
    %127 = vector.broadcast %cst_53 : f32 to vector<1x1x256xf32>
    %128 = arith.addf %127, %126 : vector<1x1x256xf32>
    %129 = arith.divf %127, %128 : vector<1x1x256xf32>
    %130 = vector.broadcast %129 : vector<1x1x256xf32> to vector<1x4x256xf32>
    %131 = arith.mulf %124, %130 : vector<1x4x256xf32>
    %c0_54 = arith.constant 0 : index
    %c0_55 = arith.constant 0 : index
    %132 = arith.index_cast %115 : i32 to index
    %133 = vector.load %arg6[%c0_54, %c0_55, %132] : memref<1x4x2304xf32, #tpu.memory_space<vmem>>, vector<1x4x256xf32>
    tpu.vector_store %arg6[%c0_54, %c0_55, %132], %131 {strides = array<i32>} : memref<1x4x2304xf32, #tpu.memory_space<vmem>>, vector<1x4x256xf32>,
    %c0_56 = arith.constant 0 : index
    %c0_57 = arith.constant 0 : index
    %134 = arith.index_cast %115 : i32 to index
    %135 = vector.load %arg3[%c0_56, %c0_57, %134] : memref<1x4x2304xf32, #tpu.memory_space<vmem>>, vector<1x4x256xf32>
    %c0_58 = arith.constant 0 : index
    %c0_59 = arith.constant 0 : index
    %136 = arith.index_cast %115 : i32 to index
    %137 = vector.load %arg5[%c0_58, %c0_59, %136] : memref<1x3x2304xf32, #tpu.memory_space<vmem>>, vector<1x3x256xf32>
    %138 = vector.extract_strided_slice %137 {offsets = [0, 2, 0], sizes = [1, 1, 256], strides = [1, 1, 1]} : vector<1x3x256xf32> to vector<1x1x256xf32>
    %139 = vector.extract_strided_slice %135 {offsets = [0, 0, 0], sizes = [1, 2, 256], strides = [1, 1, 1]} : vector<1x4x256xf32> to vector<1x2x256xf32>
    %140 = vector.broadcast %138 : vector<1x1x256xf32> to vector<1x2x256xf32>
    %141 = arith.mulf %139, %140 : vector<1x2x256xf32>
    %142 = vector.extract_strided_slice %137 {offsets = [0, 0, 0], sizes = [1, 2, 256], strides = [1, 1, 1]} : vector<1x3x256xf32> to vector<1x2x256xf32>
    %143 = arith.addf %141, %142 : vector<1x2x256xf32>
    %144 = vector.extract_strided_slice %135 {offsets = [0, 2, 0], sizes = [1, 2, 256], strides = [1, 1, 1]} : vector<1x4x256xf32> to vector<1x2x256xf32>
    %145 = math.exp %144 : vector<1x2x256xf32>
    %146 = vector.broadcast %138 : vector<1x1x256xf32> to vector<1x2x256xf32>
    %147 = arith.mulf %145, %146 : vector<1x2x256xf32>
    %c0_60 = arith.constant 0 : index
    %c0_61 = arith.constant 0 : index
    %148 = arith.index_cast %115 : i32 to index
    %149 = vector.load %arg7[%c0_60, %c0_61, %148] : memref<1x4x2304xf32, #tpu.memory_space<vmem>>, vector<1x2x256xf32>
    tpu.vector_store %arg7[%c0_60, %c0_61, %148], %143 {strides = array<i32>} : memref<1x4x2304xf32, #tpu.memory_space<vmem>>, vector<1x2x256xf32>,
    %c0_62 = arith.constant 0 : index
    %c2_63 = arith.constant 2 : index
    %150 = arith.index_cast %115 : i32 to index
    %151 = vector.load %arg7[%c0_62, %c2_63, %150] : memref<1x4x2304xf32, #tpu.memory_space<vmem>>, vector<1x2x256xf32>
    tpu.vector_store %arg7[%c0_62, %c2_63, %150], %147 {strides = array<i32>} : memref<1x4x2304xf32, #tpu.memory_space<vmem>>, vector<1x2x256xf32>,
    %c4_i32 = arith.constant 4 : i32
    %c256_i32_64 = arith.constant 256 : i32
    %152 = arith.muli %c4_i32, %c256_i32_64 : i32
    %153 = tpu.assume_multiple %152, 256 : i32
    %c0_65 = arith.constant 0 : index
    %c0_66 = arith.constant 0 : index
    %154 = arith.index_cast %153 : i32 to index
    %155 = vector.load %arg2[%c0_65, %c0_66, %154] : memref<1x4x2304xf32, #tpu.memory_space<vmem>>, vector<1x4x256xf32>
    %c0_67 = arith.constant 0 : index
    %c0_68 = arith.constant 0 : index
    %156 = arith.index_cast %153 : i32 to index
    %157 = vector.load %arg4[%c0_67, %c0_68, %156] : memref<1x1x2304xf32, #tpu.memory_space<vmem>>, vector<1x1x256xf32>
    %158 = arith.negf %155 : vector<1x4x256xf32>
    %159 = math.exp %158 : vector<1x4x256xf32>
    %cst_69 = arith.constant 1.000000e+00 : f32
    %160 = vector.broadcast %cst_69 : f32 to vector<1x4x256xf32>
    %161 = arith.addf %160, %159 : vector<1x4x256xf32>
    %162 = arith.divf %160, %161 : vector<1x4x256xf32>
    %163 = arith.negf %157 : vector<1x1x256xf32>
    %164 = math.exp %163 : vector<1x1x256xf32>
    %cst_70 = arith.constant 1.000000e+00 : f32
    %165 = vector.broadcast %cst_70 : f32 to vector<1x1x256xf32>
    %166 = arith.addf %165, %164 : vector<1x1x256xf32>
    %167 = arith.divf %165, %166 : vector<1x1x256xf32>
    %168 = vector.broadcast %167 : vector<1x1x256xf32> to vector<1x4x256xf32>
    %169 = arith.mulf %162, %168 : vector<1x4x256xf32>
    %c0_71 = arith.constant 0 : index
    %c0_72 = arith.constant 0 : index
    %170 = arith.index_cast %153 : i32 to index
    %171 = vector.load %arg6[%c0_71, %c0_72, %170] : memref<1x4x2304xf32, #tpu.memory_space<vmem>>, vector<1x4x256xf32>
    tpu.vector_store %arg6[%c0_71, %c0_72, %170], %169 {strides = array<i32>} : memref<1x4x2304xf32, #tpu.memory_space<vmem>>, vector<1x4x256xf32>,
    %c0_73 = arith.constant 0 : index
    %c0_74 = arith.constant 0 : index
    %172 = arith.index_cast %153 : i32 to index
    %173 = vector.load %arg3[%c0_73, %c0_74, %172] : memref<1x4x2304xf32, #tpu.memory_space<vmem>>, vector<1x4x256xf32>
    %c0_75 = arith.constant 0 : index
    %c0_76 = arith.constant 0 : index
    %174 = arith.index_cast %153 : i32 to index
    %175 = vector.load %arg5[%c0_75, %c0_76, %174] : memref<1x3x2304xf32, #tpu.memory_space<vmem>>, vector<1x3x256xf32>
    %176 = vector.extract_strided_slice %175 {offsets = [0, 2, 0], sizes = [1, 1, 256], strides = [1, 1, 1]} : vector<1x3x256xf32> to vector<1x1x256xf32>
    %177 = vector.extract_strided_slice %173 {offsets = [0, 0, 0], sizes = [1, 2, 256], strides = [1, 1, 1]} : vector<1x4x256xf32> to vector<1x2x256xf32>
    %178 = vector.broadcast %176 : vector<1x1x256xf32> to vector<1x2x256xf32>
    %179 = arith.mulf %177, %178 : vector<1x2x256xf32>
    %180 = vector.extract_strided_slice %175 {offsets = [0, 0, 0], sizes = [1, 2, 256], strides = [1, 1, 1]} : vector<1x3x256xf32> to vector<1x2x256xf32>
    %181 = arith.addf %179, %180 : vector<1x2x256xf32>
    %182 = vector.extract_strided_slice %173 {offsets = [0, 2, 0], sizes = [1, 2, 256], strides = [1, 1, 1]} : vector<1x4x256xf32> to vector<1x2x256xf32>
    %183 = math.exp %182 : vector<1x2x256xf32>
    %184 = vector.broadcast %176 : vector<1x1x256xf32> to vector<1x2x256xf32>
    %185 = arith.mulf %183, %184 : vector<1x2x256xf32>
    %c0_77 = arith.constant 0 : index
    %c0_78 = arith.constant 0 : index
    %186 = arith.index_cast %153 : i32 to index
    %187 = vector.load %arg7[%c0_77, %c0_78, %186] : memref<1x4x2304xf32, #tpu.memory_space<vmem>>, vector<1x2x256xf32>
    tpu.vector_store %arg7[%c0_77, %c0_78, %186], %181 {strides = array<i32>} : memref<1x4x2304xf32, #tpu.memory_space<vmem>>, vector<1x2x256xf32>,
    %c0_79 = arith.constant 0 : index
    %c2_80 = arith.constant 2 : index
    %188 = arith.index_cast %153 : i32 to index
    %189 = vector.load %arg7[%c0_79, %c2_80, %188] : memref<1x4x2304xf32, #tpu.memory_space<vmem>>, vector<1x2x256xf32>
    tpu.vector_store %arg7[%c0_79, %c2_80, %188], %185 {strides = array<i32>} : memref<1x4x2304xf32, #tpu.memory_space<vmem>>, vector<1x2x256xf32>,
    %c5_i32 = arith.constant 5 : i32
    %c256_i32_81 = arith.constant 256 : i32
    %190 = arith.muli %c5_i32, %c256_i32_81 : i32
    %191 = tpu.assume_multiple %190, 256 : i32
    %c0_82 = arith.constant 0 : index
    %c0_83 = arith.constant 0 : index
    %192 = arith.index_cast %191 : i32 to index
    %193 = vector.load %arg2[%c0_82, %c0_83, %192] : memref<1x4x2304xf32, #tpu.memory_space<vmem>>, vector<1x4x256xf32>
    %c0_84 = arith.constant 0 : index
    %c0_85 = arith.constant 0 : index
    %194 = arith.index_cast %191 : i32 to index
    %195 = vector.load %arg4[%c0_84, %c0_85, %194] : memref<1x1x2304xf32, #tpu.memory_space<vmem>>, vector<1x1x256xf32>
    %196 = arith.negf %193 : vector<1x4x256xf32>
    %197 = math.exp %196 : vector<1x4x256xf32>
    %cst_86 = arith.constant 1.000000e+00 : f32
    %198 = vector.broadcast %cst_86 : f32 to vector<1x4x256xf32>
    %199 = arith.addf %198, %197 : vector<1x4x256xf32>
    %200 = arith.divf %198, %199 : vector<1x4x256xf32>
    %201 = arith.negf %195 : vector<1x1x256xf32>
    %202 = math.exp %201 : vector<1x1x256xf32>
    %cst_87 = arith.constant 1.000000e+00 : f32
    %203 = vector.broadcast %cst_87 : f32 to vector<1x1x256xf32>
    %204 = arith.addf %203, %202 : vector<1x1x256xf32>
    %205 = arith.divf %203, %204 : vector<1x1x256xf32>
    %206 = vector.broadcast %205 : vector<1x1x256xf32> to vector<1x4x256xf32>
    %207 = arith.mulf %200, %206 : vector<1x4x256xf32>
    %c0_88 = arith.constant 0 : index
    %c0_89 = arith.constant 0 : index
    %208 = arith.index_cast %191 : i32 to index
    %209 = vector.load %arg6[%c0_88, %c0_89, %208] : memref<1x4x2304xf32, #tpu.memory_space<vmem>>, vector<1x4x256xf32>
    tpu.vector_store %arg6[%c0_88, %c0_89, %208], %207 {strides = array<i32>} : memref<1x4x2304xf32, #tpu.memory_space<vmem>>, vector<1x4x256xf32>,
    %c0_90 = arith.constant 0 : index
    %c0_91 = arith.constant 0 : index
    %210 = arith.index_cast %191 : i32 to index
    %211 = vector.load %arg3[%c0_90, %c0_91, %210] : memref<1x4x2304xf32, #tpu.memory_space<vmem>>, vector<1x4x256xf32>
    %c0_92 = arith.constant 0 : index
    %c0_93 = arith.constant 0 : index
    %212 = arith.index_cast %191 : i32 to index
    %213 = vector.load %arg5[%c0_92, %c0_93, %212] : memref<1x3x2304xf32, #tpu.memory_space<vmem>>, vector<1x3x256xf32>
    %214 = vector.extract_strided_slice %213 {offsets = [0, 2, 0], sizes = [1, 1, 256], strides = [1, 1, 1]} : vector<1x3x256xf32> to vector<1x1x256xf32>
    %215 = vector.extract_strided_slice %211 {offsets = [0, 0, 0], sizes = [1, 2, 256], strides = [1, 1, 1]} : vector<1x4x256xf32> to vector<1x2x256xf32>
    %216 = vector.broadcast %214 : vector<1x1x256xf32> to vector<1x2x256xf32>
    %217 = arith.mulf %215, %216 : vector<1x2x256xf32>
    %218 = vector.extract_strided_slice %213 {offsets = [0, 0, 0], sizes = [1, 2, 256], strides = [1, 1, 1]} : vector<1x3x256xf32> to vector<1x2x256xf32>
    %219 = arith.addf %217, %218 : vector<1x2x256xf32>
    %220 = vector.extract_strided_slice %211 {offsets = [0, 2, 0], sizes = [1, 2, 256], strides = [1, 1, 1]} : vector<1x4x256xf32> to vector<1x2x256xf32>
    %221 = math.exp %220 : vector<1x2x256xf32>
    %222 = vector.broadcast %214 : vector<1x1x256xf32> to vector<1x2x256xf32>
    %223 = arith.mulf %221, %222 : vector<1x2x256xf32>
    %c0_94 = arith.constant 0 : index
    %c0_95 = arith.constant 0 : index
    %224 = arith.index_cast %191 : i32 to index
    %225 = vector.load %arg7[%c0_94, %c0_95, %224] : memref<1x4x2304xf32, #tpu.memory_space<vmem>>, vector<1x2x256xf32>
    tpu.vector_store %arg7[%c0_94, %c0_95, %224], %219 {strides = array<i32>} : memref<1x4x2304xf32, #tpu.memory_space<vmem>>, vector<1x2x256xf32>,
    %c0_96 = arith.constant 0 : index
    %c2_97 = arith.constant 2 : index
    %226 = arith.index_cast %191 : i32 to index
    %227 = vector.load %arg7[%c0_96, %c2_97, %226] : memref<1x4x2304xf32, #tpu.memory_space<vmem>>, vector<1x2x256xf32>
    tpu.vector_store %arg7[%c0_96, %c2_97, %226], %223 {strides = array<i32>} : memref<1x4x2304xf32, #tpu.memory_space<vmem>>, vector<1x2x256xf32>,
    %c6_i32 = arith.constant 6 : i32
    %c256_i32_98 = arith.constant 256 : i32
    %228 = arith.muli %c6_i32, %c256_i32_98 : i32
    %229 = tpu.assume_multiple %228, 256 : i32
    %c0_99 = arith.constant 0 : index
    %c0_100 = arith.constant 0 : index
    %230 = arith.index_cast %229 : i32 to index
    %231 = vector.load %arg2[%c0_99, %c0_100, %230] : memref<1x4x2304xf32, #tpu.memory_space<vmem>>, vector<1x4x256xf32>
    %c0_101 = arith.constant 0 : index
    %c0_102 = arith.constant 0 : index
    %232 = arith.index_cast %229 : i32 to index
    %233 = vector.load %arg4[%c0_101, %c0_102, %232] : memref<1x1x2304xf32, #tpu.memory_space<vmem>>, vector<1x1x256xf32>
    %234 = arith.negf %231 : vector<1x4x256xf32>
    %235 = math.exp %234 : vector<1x4x256xf32>
    %cst_103 = arith.constant 1.000000e+00 : f32
    %236 = vector.broadcast %cst_103 : f32 to vector<1x4x256xf32>
    %237 = arith.addf %236, %235 : vector<1x4x256xf32>
    %238 = arith.divf %236, %237 : vector<1x4x256xf32>
    %239 = arith.negf %233 : vector<1x1x256xf32>
    %240 = math.exp %239 : vector<1x1x256xf32>
    %cst_104 = arith.constant 1.000000e+00 : f32
    %241 = vector.broadcast %cst_104 : f32 to vector<1x1x256xf32>
    %242 = arith.addf %241, %240 : vector<1x1x256xf32>
    %243 = arith.divf %241, %242 : vector<1x1x256xf32>
    %244 = vector.broadcast %243 : vector<1x1x256xf32> to vector<1x4x256xf32>
    %245 = arith.mulf %238, %244 : vector<1x4x256xf32>
    %c0_105 = arith.constant 0 : index
    %c0_106 = arith.constant 0 : index
    %246 = arith.index_cast %229 : i32 to index
    %247 = vector.load %arg6[%c0_105, %c0_106, %246] : memref<1x4x2304xf32, #tpu.memory_space<vmem>>, vector<1x4x256xf32>
    tpu.vector_store %arg6[%c0_105, %c0_106, %246], %245 {strides = array<i32>} : memref<1x4x2304xf32, #tpu.memory_space<vmem>>, vector<1x4x256xf32>,
    %c0_107 = arith.constant 0 : index
    %c0_108 = arith.constant 0 : index
    %248 = arith.index_cast %229 : i32 to index
    %249 = vector.load %arg3[%c0_107, %c0_108, %248] : memref<1x4x2304xf32, #tpu.memory_space<vmem>>, vector<1x4x256xf32>
    %c0_109 = arith.constant 0 : index
    %c0_110 = arith.constant 0 : index
    %250 = arith.index_cast %229 : i32 to index
    %251 = vector.load %arg5[%c0_109, %c0_110, %250] : memref<1x3x2304xf32, #tpu.memory_space<vmem>>, vector<1x3x256xf32>
    %252 = vector.extract_strided_slice %251 {offsets = [0, 2, 0], sizes = [1, 1, 256], strides = [1, 1, 1]} : vector<1x3x256xf32> to vector<1x1x256xf32>
    %253 = vector.extract_strided_slice %249 {offsets = [0, 0, 0], sizes = [1, 2, 256], strides = [1, 1, 1]} : vector<1x4x256xf32> to vector<1x2x256xf32>
    %254 = vector.broadcast %252 : vector<1x1x256xf32> to vector<1x2x256xf32>
    %255 = arith.mulf %253, %254 : vector<1x2x256xf32>
    %256 = vector.extract_strided_slice %251 {offsets = [0, 0, 0], sizes = [1, 2, 256], strides = [1, 1, 1]} : vector<1x3x256xf32> to vector<1x2x256xf32>
    %257 = arith.addf %255, %256 : vector<1x2x256xf32>
    %258 = vector.extract_strided_slice %249 {offsets = [0, 2, 0], sizes = [1, 2, 256], strides = [1, 1, 1]} : vector<1x4x256xf32> to vector<1x2x256xf32>
    %259 = math.exp %258 : vector<1x2x256xf32>
    %260 = vector.broadcast %252 : vector<1x1x256xf32> to vector<1x2x256xf32>
    %261 = arith.mulf %259, %260 : vector<1x2x256xf32>
    %c0_111 = arith.constant 0 : index
    %c0_112 = arith.constant 0 : index
    %262 = arith.index_cast %229 : i32 to index
    %263 = vector.load %arg7[%c0_111, %c0_112, %262] : memref<1x4x2304xf32, #tpu.memory_space<vmem>>, vector<1x2x256xf32>
    tpu.vector_store %arg7[%c0_111, %c0_112, %262], %257 {strides = array<i32>} : memref<1x4x2304xf32, #tpu.memory_space<vmem>>, vector<1x2x256xf32>,
    %c0_113 = arith.constant 0 : index
    %c2_114 = arith.constant 2 : index
    %264 = arith.index_cast %229 : i32 to index
    %265 = vector.load %arg7[%c0_113, %c2_114, %264] : memref<1x4x2304xf32, #tpu.memory_space<vmem>>, vector<1x2x256xf32>
    tpu.vector_store %arg7[%c0_113, %c2_114, %264], %261 {strides = array<i32>} : memref<1x4x2304xf32, #tpu.memory_space<vmem>>, vector<1x2x256xf32>,
    %c7_i32 = arith.constant 7 : i32
    %c256_i32_115 = arith.constant 256 : i32
    %266 = arith.muli %c7_i32, %c256_i32_115 : i32
    %267 = tpu.assume_multiple %266, 256 : i32
    %c0_116 = arith.constant 0 : index
    %c0_117 = arith.constant 0 : index
    %268 = arith.index_cast %267 : i32 to index
    %269 = vector.load %arg2[%c0_116, %c0_117, %268] : memref<1x4x2304xf32, #tpu.memory_space<vmem>>, vector<1x4x256xf32>
    %c0_118 = arith.constant 0 : index
    %c0_119 = arith.constant 0 : index
    %270 = arith.index_cast %267 : i32 to index
    %271 = vector.load %arg4[%c0_118, %c0_119, %270] : memref<1x1x2304xf32, #tpu.memory_space<vmem>>, vector<1x1x256xf32>
    %272 = arith.negf %269 : vector<1x4x256xf32>
    %273 = math.exp %272 : vector<1x4x256xf32>
    %cst_120 = arith.constant 1.000000e+00 : f32
    %274 = vector.broadcast %cst_120 : f32 to vector<1x4x256xf32>
    %275 = arith.addf %274, %273 : vector<1x4x256xf32>
    %276 = arith.divf %274, %275 : vector<1x4x256xf32>
    %277 = arith.negf %271 : vector<1x1x256xf32>
    %278 = math.exp %277 : vector<1x1x256xf32>
    %cst_121 = arith.constant 1.000000e+00 : f32
    %279 = vector.broadcast %cst_121 : f32 to vector<1x1x256xf32>
    %280 = arith.addf %279, %278 : vector<1x1x256xf32>
    %281 = arith.divf %279, %280 : vector<1x1x256xf32>
    %282 = vector.broadcast %281 : vector<1x1x256xf32> to vector<1x4x256xf32>
    %283 = arith.mulf %276, %282 : vector<1x4x256xf32>
    %c0_122 = arith.constant 0 : index
    %c0_123 = arith.constant 0 : index
    %284 = arith.index_cast %267 : i32 to index
    %285 = vector.load %arg6[%c0_122, %c0_123, %284] : memref<1x4x2304xf32, #tpu.memory_space<vmem>>, vector<1x4x256xf32>
    tpu.vector_store %arg6[%c0_122, %c0_123, %284], %283 {strides = array<i32>} : memref<1x4x2304xf32, #tpu.memory_space<vmem>>, vector<1x4x256xf32>,
    %c0_124 = arith.constant 0 : index
    %c0_125 = arith.constant 0 : index
    %286 = arith.index_cast %267 : i32 to index
    %287 = vector.load %arg3[%c0_124, %c0_125, %286] : memref<1x4x2304xf32, #tpu.memory_space<vmem>>, vector<1x4x256xf32>
    %c0_126 = arith.constant 0 : index
    %c0_127 = arith.constant 0 : index
    %288 = arith.index_cast %267 : i32 to index
    %289 = vector.load %arg5[%c0_126, %c0_127, %288] : memref<1x3x2304xf32, #tpu.memory_space<vmem>>, vector<1x3x256xf32>
    %290 = vector.extract_strided_slice %289 {offsets = [0, 2, 0], sizes = [1, 1, 256], strides = [1, 1, 1]} : vector<1x3x256xf32> to vector<1x1x256xf32>
    %291 = vector.extract_strided_slice %287 {offsets = [0, 0, 0], sizes = [1, 2, 256], strides = [1, 1, 1]} : vector<1x4x256xf32> to vector<1x2x256xf32>
    %292 = vector.broadcast %290 : vector<1x1x256xf32> to vector<1x2x256xf32>
    %293 = arith.mulf %291, %292 : vector<1x2x256xf32>
    %294 = vector.extract_strided_slice %289 {offsets = [0, 0, 0], sizes = [1, 2, 256], strides = [1, 1, 1]} : vector<1x3x256xf32> to vector<1x2x256xf32>
    %295 = arith.addf %293, %294 : vector<1x2x256xf32>
    %296 = vector.extract_strided_slice %287 {offsets = [0, 2, 0], sizes = [1, 2, 256], strides = [1, 1, 1]} : vector<1x4x256xf32> to vector<1x2x256xf32>
    %297 = math.exp %296 : vector<1x2x256xf32>
    %298 = vector.broadcast %290 : vector<1x1x256xf32> to vector<1x2x256xf32>
    %299 = arith.mulf %297, %298 : vector<1x2x256xf32>
    %c0_128 = arith.constant 0 : index
    %c0_129 = arith.constant 0 : index
    %300 = arith.index_cast %267 : i32 to index
    %301 = vector.load %arg7[%c0_128, %c0_129, %300] : memref<1x4x2304xf32, #tpu.memory_space<vmem>>, vector<1x2x256xf32>
    tpu.vector_store %arg7[%c0_128, %c0_129, %300], %295 {strides = array<i32>} : memref<1x4x2304xf32, #tpu.memory_space<vmem>>, vector<1x2x256xf32>,
    %c0_130 = arith.constant 0 : index
    %c2_131 = arith.constant 2 : index
    %302 = arith.index_cast %267 : i32 to index
    %303 = vector.load %arg7[%c0_130, %c2_131, %302] : memref<1x4x2304xf32, #tpu.memory_space<vmem>>, vector<1x2x256xf32>
    tpu.vector_store %arg7[%c0_130, %c2_131, %302], %299 {strides = array<i32>} : memref<1x4x2304xf32, #tpu.memory_space<vmem>>, vector<1x2x256xf32>,
    %c8_i32 = arith.constant 8 : i32
    %c256_i32_132 = arith.constant 256 : i32
    %304 = arith.muli %c8_i32, %c256_i32_132 : i32
    %305 = tpu.assume_multiple %304, 256 : i32
    %c0_133 = arith.constant 0 : index
    %c0_134 = arith.constant 0 : index
    %306 = arith.index_cast %305 : i32 to index
    %307 = vector.load %arg2[%c0_133, %c0_134, %306] : memref<1x4x2304xf32, #tpu.memory_space<vmem>>, vector<1x4x256xf32>
    %c0_135 = arith.constant 0 : index
    %c0_136 = arith.constant 0 : index
    %308 = arith.index_cast %305 : i32 to index
    %309 = vector.load %arg4[%c0_135, %c0_136, %308] : memref<1x1x2304xf32, #tpu.memory_space<vmem>>, vector<1x1x256xf32>
    %310 = arith.negf %307 : vector<1x4x256xf32>
    %311 = math.exp %310 : vector<1x4x256xf32>
    %cst_137 = arith.constant 1.000000e+00 : f32
    %312 = vector.broadcast %cst_137 : f32 to vector<1x4x256xf32>
    %313 = arith.addf %312, %311 : vector<1x4x256xf32>
    %314 = arith.divf %312, %313 : vector<1x4x256xf32>
    %315 = arith.negf %309 : vector<1x1x256xf32>
    %316 = math.exp %315 : vector<1x1x256xf32>
    %cst_138 = arith.constant 1.000000e+00 : f32
    %317 = vector.broadcast %cst_138 : f32 to vector<1x1x256xf32>
    %318 = arith.addf %317, %316 : vector<1x1x256xf32>
    %319 = arith.divf %317, %318 : vector<1x1x256xf32>
    %320 = vector.broadcast %319 : vector<1x1x256xf32> to vector<1x4x256xf32>
    %321 = arith.mulf %314, %320 : vector<1x4x256xf32>
    %c0_139 = arith.constant 0 : index
    %c0_140 = arith.constant 0 : index
    %322 = arith.index_cast %305 : i32 to index
    %323 = vector.load %arg6[%c0_139, %c0_140, %322] : memref<1x4x2304xf32, #tpu.memory_space<vmem>>, vector<1x4x256xf32>
    tpu.vector_store %arg6[%c0_139, %c0_140, %322], %321 {strides = array<i32>} : memref<1x4x2304xf32, #tpu.memory_space<vmem>>, vector<1x4x256xf32>,
    %c0_141 = arith.constant 0 : index
    %c0_142 = arith.constant 0 : index
    %324 = arith.index_cast %305 : i32 to index
    %325 = vector.load %arg3[%c0_141, %c0_142, %324] : memref<1x4x2304xf32, #tpu.memory_space<vmem>>, vector<1x4x256xf32>
    %c0_143 = arith.constant 0 : index
    %c0_144 = arith.constant 0 : index
    %326 = arith.index_cast %305 : i32 to index
    %327 = vector.load %arg5[%c0_143, %c0_144, %326] : memref<1x3x2304xf32, #tpu.memory_space<vmem>>, vector<1x3x256xf32>
    %328 = vector.extract_strided_slice %327 {offsets = [0, 2, 0], sizes = [1, 1, 256], strides = [1, 1, 1]} : vector<1x3x256xf32> to vector<1x1x256xf32>
    %329 = vector.extract_strided_slice %325 {offsets = [0, 0, 0], sizes = [1, 2, 256], strides = [1, 1, 1]} : vector<1x4x256xf32> to vector<1x2x256xf32>
    %330 = vector.broadcast %328 : vector<1x1x256xf32> to vector<1x2x256xf32>
    %331 = arith.mulf %329, %330 : vector<1x2x256xf32>
    %332 = vector.extract_strided_slice %327 {offsets = [0, 0, 0], sizes = [1, 2, 256], strides = [1, 1, 1]} : vector<1x3x256xf32> to vector<1x2x256xf32>
    %333 = arith.addf %331, %332 : vector<1x2x256xf32>
    %334 = vector.extract_strided_slice %325 {offsets = [0, 2, 0], sizes = [1, 2, 256], strides = [1, 1, 1]} : vector<1x4x256xf32> to vector<1x2x256xf32>
    %335 = math.exp %334 : vector<1x2x256xf32>
    %336 = vector.broadcast %328 : vector<1x1x256xf32> to vector<1x2x256xf32>
    %337 = arith.mulf %335, %336 : vector<1x2x256xf32>
    %c0_145 = arith.constant 0 : index
    %c0_146 = arith.constant 0 : index
    %338 = arith.index_cast %305 : i32 to index
    %339 = vector.load %arg7[%c0_145, %c0_146, %338] : memref<1x4x2304xf32, #tpu.memory_space<vmem>>, vector<1x2x256xf32>
    tpu.vector_store %arg7[%c0_145, %c0_146, %338], %333 {strides = array<i32>} : memref<1x4x2304xf32, #tpu.memory_space<vmem>>, vector<1x2x256xf32>,
    %c0_147 = arith.constant 0 : index
    %c2_148 = arith.constant 2 : index
    %340 = arith.index_cast %305 : i32 to index
    %341 = vector.load %arg7[%c0_147, %c2_148, %340] : memref<1x4x2304xf32, #tpu.memory_space<vmem>>, vector<1x2x256xf32>
    tpu.vector_store %arg7[%c0_147, %c2_148, %340], %337 {strides = array<i32>} : memref<1x4x2304xf32, #tpu.memory_space<vmem>>, vector<1x2x256xf32>,
    %c9_i32 = arith.constant 9 : i32
    return
  }
  func.func @transform_0(%arg0: i32, %arg1: i32) -> (i32, i32, i32) {
    %c0_i32 = arith.constant 0 : i32
    %c0_i32_0 = arith.constant 0 : i32
    return %arg0, %c0_i32, %arg1 : i32, i32, i32
  }
  func.func @transform_1(%arg0: i32, %arg1: i32) -> (i32, i32, i32) {
    %c0_i32 = arith.constant 0 : i32
    %c0_i32_0 = arith.constant 0 : i32
    return %arg0, %c0_i32, %arg1 : i32, i32, i32
  }
  func.func @transform_2(%arg0: i32, %arg1: i32) -> (i32, i32, i32) {
    %c0_i32 = arith.constant 0 : i32
    %c0_i32_0 = arith.constant 0 : i32
    return %arg0, %c0_i32, %arg1 : i32, i32, i32
  }
  func.func @transform_3(%arg0: i32, %arg1: i32) -> (i32, i32, i32) {
    %c0_i32 = arith.constant 0 : i32
    %c0_i32_0 = arith.constant 0 : i32
    %c0_i32_1 = arith.constant 0 : i32
    return %c0_i32, %c0_i32_0, %arg1 : i32, i32, i32
  }
  func.func @transform_4(%arg0: i32, %arg1: i32) -> (i32, i32, i32) {
    %c0_i32 = arith.constant 0 : i32
    %c0_i32_0 = arith.constant 0 : i32
    return %arg0, %c0_i32, %arg1 : i32, i32, i32
  }
  func.func @transform_5(%arg0: i32, %arg1: i32) -> (i32, i32, i32) {
    %c0_i32 = arith.constant 0 : i32
    %c0_i32_0 = arith.constant 0 : i32
    return %arg0, %c0_i32, %arg1 : i32, i32, i32
  }
}

</mosaic_0001>

<llo_original>
// kernel: tpu_custom_call.1
$region0: #{tpu_custom_call.1}
  #allocation0 [shape = 'u32[]', space=smem, size = 0x4, offset = 0x4, fixed_abs, tag = 'smem constant byte address 0x4 - core index']
  #allocation1 [shape = 'u32[144,128]{1,0:T(1,128)}', space=vmem, size = 0x12000, scoped, tag = 'internal scratch']
  %s0 = inlined_call_operand.hbm [shape: f32[2,4,2304], index: 0, kind: input, shape index: {}]
  %s1 = inlined_call_operand.hbm [shape: f32[2,4,2304], index: 1, kind: input, shape index: {}]
  %s2 = inlined_call_operand.vmem [shape: f32[2,1,2304], index: 2, kind: input, shape index: {}]
  %s3 = inlined_call_operand.vmem [shape: f32[1,3,2304], index: 3, kind: input, shape index: {}]
  %s4 = inlined_call_operand.hbm [shape: f32[2,4,2304], index: 4, kind: output, shape index: {0}]
  %s5 = inlined_call_operand.hbm [shape: f32[2,4,2304], index: 5, kind: output, shape index: {1}]
  %6 = xla_tuple %s4, %s5
  %s7 = sld [smem:[#allocation0]]
  $region65: #{tpu_custom_call.1} parent=0
    _
  %s9 = ssub.s32 1, %s7
  %s10 = scalar_select 0, %s9, %s7
  $region1: #{tpu_custom_call.1} parent=0
    #allocation2 [shape = 'u8[73728]{0}', space=vmem, size = 0x12000, scoped, tag = 'input window, operand 0']
    #allocation3 [shape = 's32[2]{0}', space=sflag, size = 0x8, scoped, tag = 'scoped memory for tpu_custom_call.1']
    #allocation4 [shape = 's32[2]{0}', space=sflag, size = 0x8, scoped, tag = 'scoped memory for tpu_custom_call.1']
    #allocation5 [shape = 'u8[73728]{0}', space=vmem, size = 0x12000, scoped, tag = 'input window, operand 1']
    #allocation6 [shape = 's32[2]{0}', space=sflag, size = 0x8, scoped, tag = 'scoped memory for tpu_custom_call.1']
    #allocation7 [shape = 'u8[73728]{0}', space=vmem, size = 0x12000, scoped, tag = 'output window, operand 0']
    #allocation8 [shape = 'u8[73728]{0}', space=vmem, size = 0x12000, scoped, tag = 'output window, operand 1']
    #allocation9 [shape = 's32[2]{0}', space=sflag, size = 0x8, scoped, tag = 'scoped memory for tpu_custom_call.1']
    %11 = vsyncpa [#allocation3], 0
    %s12 = scalar_lea.sflag [#allocation3], 1
    %13 = vsyncpa %s12, 0
    %14 = vsyncpa [#allocation6], 0
    %s15 = scalar_lea.sflag [#allocation6], 1
    %16 = vsyncpa %s15, 0
    %17 = vsyncpa [#allocation4], 0
    %s18 = scalar_lea.sflag [#allocation4], 1
    %19 = vsyncpa %s18, 0
    %20 = vsyncpa [#allocation9], 0
    %s21 = scalar_lea.sflag [#allocation9], 1
    %22 = vsyncpa %s21, 0
    loop: start=0, step=1, limit=4
    $region2: #{tpu_custom_call.1} parent=1 // loop_pre_header
      _
    $region3: #{tpu_custom_call.1} parent=1 // loop_header
      %s24 = sphi 0, %s28
      %p25 = scmp.ge.s32.totalorder %s24, 4
      %s31 = sphi 0, %s43
      %s32 = sphi 0, %s39
      %s33 = sphi 0, %s31
      %s34 = sphi 0, %s32
      %s35 = sphi 0, %s33
      %s36 = sphi 0, %s34
      %s48 = sphi 0, %s50
      %s51 = sphi 0, %s48
      %s52 = sphi 0, %s51
      %s68 = sphi 0, %s52
      %s76 = sphi 0, %s78
      %s79 = sphi 0, %s76
      %s80 = sphi 0, %s79
      %s96 = sphi 0, %s80
      %s104 = sphi 0, %s106
      %s107 = sphi 0, %s104
      %s108 = sphi 0, %s107
      %s124 = sphi 0, %s108
      %s130 = sphi 0, %s132
      %s133 = sphi 0, %s130
      %s134 = sphi 0, %s133
      %s150 = sphi 0, %s134
      %s158 = sphi 0, %s160
      %s161 = sphi 0, %s158
      %s162 = sphi 0, %s161
      %s178 = sphi 0, %s162
      %s186 = sphi 0, %s188
      %s189 = sphi 0, %s186
      %s190 = sphi 0, %s189
      %s206 = sphi 0, %s190
    $region4: #{tpu_custom_call.1} parent=1 // loop_header_branch
      %27 = sbr.rel (%p25) target = $region8
    $region5: #{tpu_custom_call.1} parent=1 // loop_body
      %s29 = ssub.s32 %s24, 1
      %s30 = ssub.s32 %s24, 2
      %s37 = sadd.s32 1, %s32
      %p38 = scmp.ge.s32.totalorder %s37, 1
      %s39 = scalar_select %p38, 0, %s37
      %s40 = sadd.s32 1, %s31
      %s41 = scalar_select %p38, %s40, %s31
      %p42 = scmp.ge.s32.totalorder %s41, 2
      %s43 = scalar_select %p42, 0, %s41
      %s44 = ssub.s32 %s31, %s43
      %s45 = ssub.s32 %s32, %s39
      %s46 = sor.u32 %s44, %s45
      %p47 = scmp.eq.s32.totalorder %s46, 0
      %s49 = sadd.s32 %s48, 1
      %s50 = scalar_select %p47, %s48, %s49
      %p53 = pneg %p47
      %p54 = scmp.eq.s32.totalorder %s24, 1
      %p55 = por %p53, %p54
      %p56 = scmp.ne.s32.totalorder %s48, %s51
      %p57 = scmp.eq.s32.totalorder %s24, 0
      %p58 = por %p56, %p57
      %p59 = scmp.ne.s32.totalorder %s48, %s51
      %p60 = scmp.eq.s32.totalorder %s29, 1
      %p61 = por %p59, %p60
      %p62 = scmp.ne.s32.totalorder %s51, %s52
      %p63 = scmp.eq.s32.totalorder %s29, 0
      %p64 = por %p62, %p63
      %p65 = scmp.ne.s32.totalorder %s51, %s52
      %p66 = scmp.eq.s32.totalorder %s30, 1
      %p67 = por %p65, %p66
      %p69 = scmp.ne.s32.totalorder %s52, %s68
      %p70 = scmp.eq.s32.totalorder %s30, 0
      %p71 = por %p69, %p70
      %s72 = ssub.s32 %s31, %s43
      %s73 = ssub.s32 %s32, %s39
      %s74 = sor.u32 %s72, %s73
      %p75 = scmp.eq.s32.totalorder %s74, 0
      %s77 = sadd.s32 %s76, 1
      %s78 = scalar_select %p75, %s76, %s77
      %p81 = pneg %p75
      %p82 = scmp.eq.s32.totalorder %s24, 1
      %p83 = por %p81, %p82
      %p84 = scmp.ne.s32.totalorder %s76, %s79
      %p85 = scmp.eq.s32.totalorder %s24, 0
      %p86 = por %p84, %p85
      %p87 = scmp.ne.s32.totalorder %s76, %s79
      %p88 = scmp.eq.s32.totalorder %s29, 1
      %p89 = por %p87, %p88
      %p90 = scmp.ne.s32.totalorder %s79, %s80
      %p91 = scmp.eq.s32.totalorder %s29, 0
      %p92 = por %p90, %p91
      %p93 = scmp.ne.s32.totalorder %s79, %s80
      %p94 = scmp.eq.s32.totalorder %s30, 1
      %p95 = por %p93, %p94
      %p97 = scmp.ne.s32.totalorder %s80, %s96
      %p98 = scmp.eq.s32.totalorder %s30, 0
      %p99 = por %p97, %p98
      %s100 = ssub.s32 %s31, %s43
      %s101 = ssub.s32 %s32, %s39
      %s102 = sor.u32 %s100, %s101
      %p103 = scmp.eq.s32.totalorder %s102, 0
      %s105 = sadd.s32 %s104, 1
      %s106 = scalar_select %p103, %s104, %s105
      %p109 = pneg %p103
      %p110 = scmp.eq.s32.totalorder %s24, 1
      %p111 = por %p109, %p110
      %p112 = scmp.ne.s32.totalorder %s104, %s107
      %p113 = scmp.eq.s32.totalorder %s24, 0
      %p114 = por %p112, %p113
      %p115 = scmp.ne.s32.totalorder %s104, %s107
      %p116 = scmp.eq.s32.totalorder %s29, 1
      %p117 = por %p115, %p116
      %p118 = scmp.ne.s32.totalorder %s107, %s108
      %p119 = scmp.eq.s32.totalorder %s29, 0
      %p120 = por %p118, %p119
      %p121 = scmp.ne.s32.totalorder %s107, %s108
      %p122 = scmp.eq.s32.totalorder %s30, 1
      %p123 = por %p121, %p122
      %p125 = scmp.ne.s32.totalorder %s108, %s124
      %p126 = scmp.eq.s32.totalorder %s30, 0
      %p127 = por %p125, %p126
      %s128 = ssub.s32 %s32, %s39
      %p129 = scmp.eq.s32.totalorder %s128, 0
      %s131 = sadd.s32 %s130, 1
      %s132 = scalar_select %p129, %s130, %s131
      %p135 = pneg %p129
      %p136 = scmp.eq.s32.totalorder %s24, 1
      %p137 = por %p135, %p136
      %p138 = scmp.ne.s32.totalorder %s130, %s133
      %p139 = scmp.eq.s32.totalorder %s24, 0
      %p140 = por %p138, %p139
      %p141 = scmp.ne.s32.totalorder %s130, %s133
      %p142 = scmp.eq.s32.totalorder %s29, 1
      %p143 = por %p141, %p142
      %p144 = scmp.ne.s32.totalorder %s133, %s134
      %p145 = scmp.eq.s32.totalorder %s29, 0
      %p146 = por %p144, %p145
      %p147 = scmp.ne.s32.totalorder %s133, %s134
      %p148 = scmp.eq.s32.totalorder %s30, 1
      %p149 = por %p147, %p148
      %p151 = scmp.ne.s32.totalorder %s134, %s150
      %p152 = scmp.eq.s32.totalorder %s30, 0
      %p153 = por %p151, %p152
      %s154 = ssub.s32 %s31, %s43
      %s155 = ssub.s32 %s32, %s39
      %s156 = sor.u32 %s154, %s155
      %p157 = scmp.eq.s32.totalorder %s156, 0
      %s159 = sadd.s32 %s158, 1
      %s160 = scalar_select %p157, %s158, %s159
      %p163 = pneg %p157
      %p164 = scmp.eq.s32.totalorder %s24, 1
      %p165 = por %p163, %p164
      %p166 = scmp.ne.s32.totalorder %s158, %s161
      %p167 = scmp.eq.s32.totalorder %s24, 0
      %p168 = por %p166, %p167
      %p169 = scmp.ne.s32.totalorder %s158, %s161
      %p170 = scmp.eq.s32.totalorder %s29, 1
      %p171 = por %p169, %p170
      %p172 = scmp.ne.s32.totalorder %s161, %s162
      %p173 = scmp.eq.s32.totalorder %s29, 0
      %p174 = por %p172, %p173
      %p175 = scmp.ne.s32.totalorder %s161, %s162
      %p176 = scmp.eq.s32.totalorder %s30, 1
      %p177 = por %p175, %p176
      %p179 = scmp.ne.s32.totalorder %s162, %s178
      %p180 = scmp.eq.s32.totalorder %s30, 0
      %p181 = por %p179, %p180
      %s182 = ssub.s32 %s31, %s43
      %s183 = ssub.s32 %s32, %s39
      %s184 = sor.u32 %s182, %s183
      %p185 = scmp.eq.s32.totalorder %s184, 0
      %s187 = sadd.s32 %s186, 1
      %s188 = scalar_select %p185, %s186, %s187
      %p191 = pneg %p185
      %p192 = scmp.eq.s32.totalorder %s24, 1
      %p193 = por %p191, %p192
      %p194 = scmp.ne.s32.totalorder %s186, %s189
      %p195 = scmp.eq.s32.totalorder %s24, 0
      %p196 = por %p194, %p195
      %p197 = scmp.ne.s32.totalorder %s186, %s189
      %p198 = scmp.eq.s32.totalorder %s29, 1
      %p199 = por %p197, %p198
      %p200 = scmp.ne.s32.totalorder %s189, %s190
      %p201 = scmp.eq.s32.totalorder %s29, 0
      %p202 = por %p200, %p201
      %p203 = scmp.ne.s32.totalorder %s189, %s190
      %p204 = scmp.eq.s32.totalorder %s30, 1
      %p205 = por %p203, %p204
      %p207 = scmp.ne.s32.totalorder %s190, %s206
      %p208 = scmp.eq.s32.totalorder %s30, 0
      %p209 = por %p207, %p208
      %p210 = scmp.le.s32.totalorder 1, %s24
      %p211 = scmp.lt.s32.totalorder %s24, 3
      %p212 = pnand %p210, %p211
      %p213 = pneg %p212
      // Predicated region
      $region9: #{tpu_custom_call.1} parent=5 // pred_check
        _
      $region10: #{tpu_custom_call.1} parent=5 // pred_check_branch
        %215 = sbr.rel (%p212) target = $region12
      $region11: #{tpu_custom_call.1} parent=5 // pred_region
        %s216 = ssub.s32 %s24, 1
        // Predicated region
        $region13: #{tpu_custom_call.1} parent=11 // pred_check
          %p217 = pneg %p146
        $region14: #{tpu_custom_call.1} parent=11 // pred_check_branch
          %219 = sbr.rel (%p217) target = $region16
        $region15: #{tpu_custom_call.1} parent=11 // pred_region
          %s220 = smul.u32 18, %s34
          %p221 = scmp.lt.s32.totalorder %s220, 17
          %s222 = scalar_select %p221, %s220, 17
          %s223 = smul.addr %s222, 4
          %s224 = scalar_lea.vmem %s3, %s223
          %s225 = smul.u32 18, %s34
        $region16: #{tpu_custom_call.1} parent=11 // pred_fallthru
          _
      $region12: #{tpu_custom_call.1} parent=5 // pred_fallthru
        _
      %p226 = scmp.lt.s32.totalorder %s24, 2
      // Predicated region
      $region17: #{tpu_custom_call.1} parent=5 // pred_check
        %p227 = pneg %p226
      $region18: #{tpu_custom_call.1} parent=5 // pred_check_branch
        %229 = sbr.rel (%p227) target = $region20
      $region19: #{tpu_custom_call.1} parent=5 // pred_region
        // Predicated region
        $region21: #{tpu_custom_call.1} parent=19 // pred_check
          %p230 = pneg %p58
        $region22: #{tpu_custom_call.1} parent=19 // pred_check_branch
          %232 = sbr.rel (%p230) target = $region24
        $region23: #{tpu_custom_call.1} parent=19 // pred_region
          %s233 = sand.u32 %s48, 1
          %s234 = scalar_lea.sflag [#allocation3], %s233
          %s235 = sand.u32 %s48, 1
          %s236 = smul.addr %s235, 72
          %s237 = scalar_lea.vmem [#allocation2], %s236
          %s238 = smul.u32 18, %s32
          %s240 = ssub.s32 1152, 1152
          %241 = vsyncadd %s234, %s240
          %s242 = smul.addr %s31, 18
          %s243 = sadd.s32 %s238, %s242
          %s244 = smul.addr %s243, 64
          %s245 = scalar_lea.hbm %s0, %s244
          %s247 = sshll.u32 %s237, 4
          %s248 = int_to_ptr.vmem [resolvable:$true] %s247
          %250 = dma.hbm_to_vmem [thread:$0]  %s245, 1152, %s248, %s234
        $region24: #{tpu_custom_call.1} parent=19 // pred_fallthru
          _
        // Predicated region
        $region25: #{tpu_custom_call.1} parent=19 // pred_check
          %p251 = pneg %p86
        $region26: #{tpu_custom_call.1} parent=19 // pred_check_branch
          %253 = sbr.rel (%p251) target = $region28
        $region27: #{tpu_custom_call.1} parent=19 // pred_region
          %s254 = sand.u32 %s76, 1
          %s255 = scalar_lea.sflag [#allocation6], %s254
          %s256 = sand.u32 %s76, 1
          %s257 = smul.addr %s256, 72
          %s258 = scalar_lea.vmem [#allocation5], %s257
          %s259 = smul.u32 18, %s32
          %s261 = ssub.s32 1152, 1152
          %262 = vsyncadd %s255, %s261
          %s263 = smul.addr %s31, 18
          %s264 = sadd.s32 %s259, %s263
          %s265 = smul.addr %s264, 64
          %s266 = scalar_lea.hbm %s1, %s265
          %s268 = sshll.u32 %s258, 4
          %s269 = int_to_ptr.vmem [resolvable:$true] %s268
          %271 = dma.hbm_to_vmem [thread:$0]  %s266, 1152, %s269, %s255
        $region28: #{tpu_custom_call.1} parent=19 // pred_fallthru
          _
        // Predicated region
        $region29: #{tpu_custom_call.1} parent=19 // pred_check
          %p272 = pneg %p114
        $region30: #{tpu_custom_call.1} parent=19 // pred_check_branch
          %274 = sbr.rel (%p272) target = $region32
        $region31: #{tpu_custom_call.1} parent=19 // pred_region
          %s275 = smul.u32 18, %s32
          %p276 = scmp.lt.s32.totalorder %s31, 1
          %s277 = scalar_select %p276, %s31, 1
          %p278 = scmp.lt.s32.totalorder %s275, 17
          %s279 = scalar_select %p278, %s275, 17
          %s280 = smul.addr %s277, 18
          %s281 = sadd.s32 %s279, %s280
          %s282 = scalar_lea.vmem %s2, %s281
          %s283 = smul.u32 18, %s32
        $region32: #{tpu_custom_call.1} parent=19 // pred_fallthru
          _
      $region20: #{tpu_custom_call.1} parent=5 // pred_fallthru
        _
      %p284 = scmp.le.s32.totalorder 1, %s24
      %p285 = scmp.lt.s32.totalorder %s24, 3
      %p286 = pnand %p284, %p285
      %p287 = pneg %p286
      // Predicated region
      $region33: #{tpu_custom_call.1} parent=5 // pred_check
        _
      $region34: #{tpu_custom_call.1} parent=5 // pred_check_branch
        %289 = sbr.rel (%p286) target = $region36
      $region35: #{tpu_custom_call.1} parent=5 // pred_region
        %s290 = ssub.s32 %s24, 1
        %s291 = sand.u32 %s51, 1
        %s292 = scalar_lea.sflag [#allocation3], %s291
        %s293 = sand.u32 %s51, 1
        %s294 = smul.addr %s293, 72
        %s295 = scalar_lea.vmem [#allocation2], %s294
        // Predicated region
        $region37: #{tpu_custom_call.1} parent=35 // pred_check
          %p296 = pneg %p64
        $region38: #{tpu_custom_call.1} parent=35 // pred_check_branch
          %298 = sbr.rel (%p296) target = $region40
        $region39: #{tpu_custom_call.1} parent=35 // pred_region
          %299 = dma.done %s292, 1152
        $region40: #{tpu_custom_call.1} parent=35 // pred_fallthru
          _
        %s300 = sand.u32 %s79, 1
        %s301 = scalar_lea.sflag [#allocation6], %s300
        %s302 = sand.u32 %s79, 1
        %s303 = smul.addr %s302, 72
        %s304 = scalar_lea.vmem [#allocation5], %s303
        // Predicated region
        $region41: #{tpu_custom_call.1} parent=35 // pred_check
          %p305 = pneg %p92
        $region42: #{tpu_custom_call.1} parent=35 // pred_check_branch
          %307 = sbr.rel (%p305) target = $region44
        $region43: #{tpu_custom_call.1} parent=35 // pred_region
          %308 = dma.done %s301, 1152
        $region44: #{tpu_custom_call.1} parent=35 // pred_fallthru
          _
        %s309 = sand.u32 %s51, 1
        %s310 = scalar_lea.sflag [#allocation3], %s309
        %s311 = sand.u32 %s51, 1
        %s312 = smul.addr %s311, 72
        %s313 = scalar_lea.vmem [#allocation2], %s312
        %p314 = pneg %p64
        %p315 = pneg %p61
        %s316 = sand.u32 %s79, 1
        %s317 = scalar_lea.sflag [#allocation6], %s316
        %s318 = sand.u32 %s79, 1
        %s319 = smul.addr %s318, 72
        %s320 = scalar_lea.vmem [#allocation5], %s319
        %p321 = pneg %p92
        %p322 = pneg %p89
        %s323 = smul.u32 18, %s34
        %p324 = scmp.lt.s32.totalorder %s33, 1
        %s325 = scalar_select %p324, %s33, 1
        %p326 = scmp.lt.s32.totalorder %s323, 17
        %s327 = scalar_select %p326, %s323, 17
        %s328 = smul.addr %s325, 18
        %s329 = sadd.s32 %s327, %s328
        %s330 = scalar_lea.vmem %s2, %s329
        %p331 = pneg %p120
        %p332 = pneg %p117
        %s333 = smul.u32 18, %s34
        %p334 = scmp.lt.s32.totalorder %s333, 17
        %s335 = scalar_select %p334, %s333, 17
        %s336 = smul.addr %s335, 4
        %s337 = scalar_lea.vmem %s3, %s336
        %p338 = pneg %p146
        %p339 = pneg %p143
        %p340 = pneg %p174
        %p341 = pneg %p171
        %s342 = sand.u32 %s161, 1
        %s343 = scalar_lea.sflag [#allocation4], %s342
        %s344 = sand.u32 %s161, 1
        %s345 = smul.addr %s344, 72
        %s346 = scalar_lea.vmem [#allocation7], %s345
        %p347 = pneg %p202
        %p348 = pneg %p199
        %s349 = sand.u32 %s189, 1
        %s350 = scalar_lea.sflag [#allocation9], %s349
        %s351 = sand.u32 %s189, 1
        %s352 = smul.addr %s351, 72
        %s353 = scalar_lea.vmem [#allocation8], %s352
        %s354 = smul.u32 18, %s34
        %s355 = smul.u32 18, %s34
        %s356 = smul.u32 18, %s34
        %p357 = scmp.lt.s32.totalorder %s33, 1
        %s358 = scalar_select %p357, %s33, 1
        %p359 = scmp.lt.s32.totalorder %s356, 17
        %s360 = scalar_select %p359, %s356, 17
        %s361 = smul.addr %s358, 18
        %s362 = sadd.s32 %s360, %s361
        %s363 = scalar_lea.vmem %s2, %s362
        %s364 = smul.u32 18, %s34
        %s365 = smul.u32 18, %s34
        %p366 = scmp.lt.s32.totalorder %s365, 17
        %s367 = scalar_select %p366, %s365, 17
        %s368 = smul.addr %s367, 4
        %s369 = scalar_lea.vmem %s3, %s368
        %s370 = smul.u32 18, %s34
        %s371 = smul.u32 18, %s34
        %s372 = smul.u32 18, %s34
        %v373 = vld [vmem:[%s295] sm:$0xff]
        %v374 = vld [vmem:[%s363] sm:$0x3]
        %v375 = vxor.u32 %v373, 2147483648
        %v376 = vmul.f32 %v375, 1.442695
        %v377 = vpow.pop %v376
        %v378 = vadd.f32 %v377, 1.0
        %v379 = vrcp.pop %v378
        %v380 = vmul.f32 1.0, %v379
        %v381 = vxor.u32 %v374, 2147483648
        %v382 = vmul.f32 %v381, 1.442695
        %v383 = vpow.pop %v382
        %v384 = vadd.f32 %v383, 1.0
        %v385 = vrcp.pop %v384
        %v386 = vmul.f32 1.0, %v385
        %v388 = vlaneseq
        %v389 = vshrl.u32 %v388, 7
        %v390 = vsub.s32 0, %v389
        %v391 = vrot.slane %v386, %v390
        %v392 = vlaneseq
        %v393 = vshrl.u32 %v392, 7
        %v394 = vsub.s32 1, %v393
        %v395 = vrot.slane %v386, %v394
        %v396 = vcombine.low %v391, %v395
        %v398 = vmul.f32 %v380, %v396
        %399 = vst [vmem:[%s346] sm:$0xff] %v398
        %v400 = vld [vmem:[%s304] sm:$0xff]
        %v401 = vld [vmem:[%s369] sm:$0x77]
        %v403 = vlaneseq
        %v404 = vshrl.u32 %v403, 7
        %v405 = vsub.s32 2, %v404
        %v406 = vrot.slane %v401, %v405
        %v407 = vlaneseq
        %v408 = vshrl.u32 %v407, 7
        %v409 = vsub.s32 6, %v408
        %v410 = vrot.slane %v401, %v409
        %v413 = vlaneseq
        %v414 = vshrl.u32 %v413, 7
        %v415 = vsub.s32 2, %v414
        %v416 = vrot.slane %v406, %v415
        %v417 = vlaneseq
        %v418 = vshrl.u32 %v417, 7
        %v419 = vsub.s32 2, %v418
        %v420 = vrot.slane %v410, %v419
        %v423 = vcombine.low %v416, %v420
        %v425 = vmul.f32 %v400, %v423
        %v426 = vadd.f32 %v425, %v401
        %v427 = vmul.f32 %v400, 1.442695
        %v428 = vpow.pop %v427
        %v429 = vrot.slane %v423, 6
        %v431 = vmul.f32 %v428, %v429
        %432 = vst [vmem:[%s353] sm:$0x33] %v426
        %433 = vst [vmem:[%s353] sm:$0xcc] %v431
        %s434 = scalar_lea.vmem %s295, 8 [#allocation2]
        %v435 = vld [vmem:[%s434] sm:$0xff]
        %s436 = scalar_lea.vmem %s363, 2
        %v437 = vld [vmem:[%s436] sm:$0x3]
        %v438 = vxor.u32 %v435, 2147483648
        %v439 = vmul.f32 %v438, 1.442695
        %v440 = vpow.pop %v439
        %v441 = vadd.f32 %v440, 1.0
        %v442 = vrcp.pop %v441
        %v443 = vmul.f32 1.0, %v442
        %v444 = vxor.u32 %v437, 2147483648
        %v445 = vmul.f32 %v444, 1.442695
        %v446 = vpow.pop %v445
        %v447 = vadd.f32 %v446, 1.0
        %v448 = vrcp.pop %v447
        %v449 = vmul.f32 1.0, %v448
        %v451 = vlaneseq
        %v452 = vshrl.u32 %v451, 7
        %v453 = vsub.s32 0, %v452
        %v454 = vrot.slane %v449, %v453
        %v455 = vlaneseq
        %v456 = vshrl.u32 %v455, 7
        %v457 = vsub.s32 1, %v456
        %v458 = vrot.slane %v449, %v457
        %v459 = vcombine.low %v454, %v458
        %v461 = vmul.f32 %v443, %v459
        %s462 = scalar_lea.vmem %s346, 8 [#allocation7]
        %463 = vst [vmem:[%s462] sm:$0xff] %v461
        %s464 = scalar_lea.vmem %s304, 8 [#allocation5]
        %v465 = vld [vmem:[%s464] sm:$0xff]
        %s466 = scalar_lea.vmem %s369, 8
        %v467 = vld [vmem:[%s466] sm:$0x77]
        %v469 = vlaneseq
        %v470 = vshrl.u32 %v469, 7
        %v471 = vsub.s32 2, %v470
        %v472 = vrot.slane %v467, %v471
        %v473 = vlaneseq
        %v474 = vshrl.u32 %v473, 7
        %v475 = vsub.s32 6, %v474
        %v476 = vrot.slane %v467, %v475
        %v479 = vlaneseq
        %v480 = vshrl.u32 %v479, 7
        %v481 = vsub.s32 2, %v480
        %v482 = vrot.slane %v472, %v481
        %v483 = vlaneseq
        %v484 = vshrl.u32 %v483, 7
        %v485 = vsub.s32 2, %v484
        %v486 = vrot.slane %v476, %v485
        %v489 = vcombine.low %v482, %v486
        %v491 = vmul.f32 %v465, %v489
        %v492 = vadd.f32 %v491, %v467
        %v493 = vmul.f32 %v465, 1.442695
        %v494 = vpow.pop %v493
        %v495 = vrot.slane %v489, 6
        %v497 = vmul.f32 %v494, %v495
        %s498 = scalar_lea.vmem %s353, 8 [#allocation8]
        %499 = vst [vmem:[%s498] sm:$0x33] %v492
        %500 = vst [vmem:[%s498] sm:$0xcc] %v497
        %s501 = scalar_lea.vmem %s295, 16 [#allocation2]
        %v502 = vld [vmem:[%s501] sm:$0xff]
        %s503 = scalar_lea.vmem %s363, 4
        %v504 = vld [vmem:[%s503] sm:$0x3]
        %v505 = vxor.u32 %v502, 2147483648
        %v506 = vmul.f32 %v505, 1.442695
        %v507 = vpow.pop %v506
        %v508 = vadd.f32 %v507, 1.0
        %v509 = vrcp.pop %v508
        %v510 = vmul.f32 1.0, %v509
        %v511 = vxor.u32 %v504, 2147483648
        %v512 = vmul.f32 %v511, 1.442695
        %v513 = vpow.pop %v512
        %v514 = vadd.f32 %v513, 1.0
        %v515 = vrcp.pop %v514
        %v516 = vmul.f32 1.0, %v515
        %v518 = vlaneseq
        %v519 = vshrl.u32 %v518, 7
        %v520 = vsub.s32 0, %v519
        %v521 = vrot.slane %v516, %v520
        %v522 = vlaneseq
        %v523 = vshrl.u32 %v522, 7
        %v524 = vsub.s32 1, %v523
        %v525 = vrot.slane %v516, %v524
        %v526 = vcombine.low %v521, %v525
        %v528 = vmul.f32 %v510, %v526
        %s529 = scalar_lea.vmem %s346, 16 [#allocation7]
        %530 = vst [vmem:[%s529] sm:$0xff] %v528
        %s531 = scalar_lea.vmem %s304, 16 [#allocation5]
        %v532 = vld [vmem:[%s531] sm:$0xff]
        %s533 = scalar_lea.vmem %s369, 16
        %v534 = vld [vmem:[%s533] sm:$0x77]
        %v536 = vlaneseq
        %v537 = vshrl.u32 %v536, 7
        %v538 = vsub.s32 2, %v537
        %v539 = vrot.slane %v534, %v538
        %v540 = vlaneseq
        %v541 = vshrl.u32 %v540, 7
        %v542 = vsub.s32 6, %v541
        %v543 = vrot.slane %v534, %v542
        %v546 = vlaneseq
        %v547 = vshrl.u32 %v546, 7
        %v548 = vsub.s32 2, %v547
        %v549 = vrot.slane %v539, %v548
        %v550 = vlaneseq
        %v551 = vshrl.u32 %v550, 7
        %v552 = vsub.s32 2, %v551
        %v553 = vrot.slane %v543, %v552
        %v556 = vcombine.low %v549, %v553
        %v558 = vmul.f32 %v532, %v556
        %v559 = vadd.f32 %v558, %v534
        %v560 = vmul.f32 %v532, 1.442695
        %v561 = vpow.pop %v560
        %v562 = vrot.slane %v556, 6
        %v564 = vmul.f32 %v561, %v562
        %s565 = scalar_lea.vmem %s353, 16 [#allocation8]
        %566 = vst [vmem:[%s565] sm:$0x33] %v559
        %567 = vst [vmem:[%s565] sm:$0xcc] %v564
        %s568 = scalar_lea.vmem %s295, 24 [#allocation2]
        %v569 = vld [vmem:[%s568] sm:$0xff]
        %s570 = scalar_lea.vmem %s363, 6
        %v571 = vld [vmem:[%s570] sm:$0x3]
        %v572 = vxor.u32 %v569, 2147483648
        %v573 = vmul.f32 %v572, 1.442695
        %v574 = vpow.pop %v573
        %v575 = vadd.f32 %v574, 1.0
        %v576 = vrcp.pop %v575
        %v577 = vmul.f32 1.0, %v576
        %v578 = vxor.u32 %v571, 2147483648
        %v579 = vmul.f32 %v578, 1.442695
        %v580 = vpow.pop %v579
        %v581 = vadd.f32 %v580, 1.0
        %v582 = vrcp.pop %v581
        %v583 = vmul.f32 1.0, %v582
        %v585 = vlaneseq
        %v586 = vshrl.u32 %v585, 7
        %v587 = vsub.s32 0, %v586
        %v588 = vrot.slane %v583, %v587
        %v589 = vlaneseq
        %v590 = vshrl.u32 %v589, 7
        %v591 = vsub.s32 1, %v590
        %v592 = vrot.slane %v583, %v591
        %v593 = vcombine.low %v588, %v592
        %v595 = vmul.f32 %v577, %v593
        %s596 = scalar_lea.vmem %s346, 24 [#allocation7]
        %597 = vst [vmem:[%s596] sm:$0xff] %v595
        %s598 = scalar_lea.vmem %s304, 24 [#allocation5]
        %v599 = vld [vmem:[%s598] sm:$0xff]
        %s600 = scalar_lea.vmem %s369, 24
        %v601 = vld [vmem:[%s600] sm:$0x77]
        %v603 = vlaneseq
        %v604 = vshrl.u32 %v603, 7
        %v605 = vsub.s32 2, %v604
        %v606 = vrot.slane %v601, %v605
        %v607 = vlaneseq
        %v608 = vshrl.u32 %v607, 7
        %v609 = vsub.s32 6, %v608
        %v610 = vrot.slane %v601, %v609
        %v613 = vlaneseq
        %v614 = vshrl.u32 %v613, 7
        %v615 = vsub.s32 2, %v614
        %v616 = vrot.slane %v606, %v615
        %v617 = vlaneseq
        %v618 = vshrl.u32 %v617, 7
        %v619 = vsub.s32 2, %v618
        %v620 = vrot.slane %v610, %v619
        %v623 = vcombine.low %v616, %v620
        %v625 = vmul.f32 %v599, %v623
        %v626 = vadd.f32 %v625, %v601
        %v627 = vmul.f32 %v599, 1.442695
        %v628 = vpow.pop %v627
        %v629 = vrot.slane %v623, 6
        %v631 = vmul.f32 %v628, %v629
        %s632 = scalar_lea.vmem %s353, 24 [#allocation8]
        %633 = vst [vmem:[%s632] sm:$0x33] %v626
        %634 = vst [vmem:[%s632] sm:$0xcc] %v631
        %s635 = scalar_lea.vmem %s295, 32 [#allocation2]
        %v636 = vld [vmem:[%s635] sm:$0xff]
        %s637 = scalar_lea.vmem %s363, 8
        %v638 = vld [vmem:[%s637] sm:$0x3]
        %v639 = vxor.u32 %v636, 2147483648
        %v640 = vmul.f32 %v639, 1.442695
        %v641 = vpow.pop %v640
        %v642 = vadd.f32 %v641, 1.0
        %v643 = vrcp.pop %v642
        %v644 = vmul.f32 1.0, %v643
        %v645 = vxor.u32 %v638, 2147483648
        %v646 = vmul.f32 %v645, 1.442695
        %v647 = vpow.pop %v646
        %v648 = vadd.f32 %v647, 1.0
        %v649 = vrcp.pop %v648
        %v650 = vmul.f32 1.0, %v649
        %v652 = vlaneseq
        %v653 = vshrl.u32 %v652, 7
        %v654 = vsub.s32 0, %v653
        %v655 = vrot.slane %v650, %v654
        %v656 = vlaneseq
        %v657 = vshrl.u32 %v656, 7
        %v658 = vsub.s32 1, %v657
        %v659 = vrot.slane %v650, %v658
        %v660 = vcombine.low %v655, %v659
        %v662 = vmul.f32 %v644, %v660
        %s663 = scalar_lea.vmem %s346, 32 [#allocation7]
        %664 = vst [vmem:[%s663] sm:$0xff] %v662
        %s665 = scalar_lea.vmem %s304, 32 [#allocation5]
        %v666 = vld [vmem:[%s665] sm:$0xff]
        %s667 = scalar_lea.vmem %s369, 32
        %v668 = vld [vmem:[%s667] sm:$0x77]
        %v670 = vlaneseq
        %v671 = vshrl.u32 %v670, 7
        %v672 = vsub.s32 2, %v671
        %v673 = vrot.slane %v668, %v672
        %v674 = vlaneseq
        %v675 = vshrl.u32 %v674, 7
        %v676 = vsub.s32 6, %v675
        %v677 = vrot.slane %v668, %v676
        %v680 = vlaneseq
        %v681 = vshrl.u32 %v680, 7
        %v682 = vsub.s32 2, %v681
        %v683 = vrot.slane %v673, %v682
        %v684 = vlaneseq
        %v685 = vshrl.u32 %v684, 7
        %v686 = vsub.s32 2, %v685
        %v687 = vrot.slane %v677, %v686
        %v690 = vcombine.low %v683, %v687
        %v692 = vmul.f32 %v666, %v690
        %v693 = vadd.f32 %v692, %v668
        %v694 = vmul.f32 %v666, 1.442695
        %v695 = vpow.pop %v694
        %v696 = vrot.slane %v690, 6
        %v698 = vmul.f32 %v695, %v696
        %s699 = scalar_lea.vmem %s353, 32 [#allocation8]
        %700 = vst [vmem:[%s699] sm:$0x33] %v693
        %701 = vst [vmem:[%s699] sm:$0xcc] %v698
        %s702 = scalar_lea.vmem %s295, 40 [#allocation2]
        %v703 = vld [vmem:[%s702] sm:$0xff]
        %s704 = scalar_lea.vmem %s363, 10
        %v705 = vld [vmem:[%s704] sm:$0x3]
        %v706 = vxor.u32 %v703, 2147483648
        %v707 = vmul.f32 %v706, 1.442695
        %v708 = vpow.pop %v707
        %v709 = vadd.f32 %v708, 1.0
        %v710 = vrcp.pop %v709
        %v711 = vmul.f32 1.0, %v710
        %v712 = vxor.u32 %v705, 2147483648
        %v713 = vmul.f32 %v712, 1.442695
        %v714 = vpow.pop %v713
        %v715 = vadd.f32 %v714, 1.0
        %v716 = vrcp.pop %v715
        %v717 = vmul.f32 1.0, %v716
        %v719 = vlaneseq
        %v720 = vshrl.u32 %v719, 7
        %v721 = vsub.s32 0, %v720
        %v722 = vrot.slane %v717, %v721
        %v723 = vlaneseq
        %v724 = vshrl.u32 %v723, 7
        %v725 = vsub.s32 1, %v724
        %v726 = vrot.slane %v717, %v725
        %v727 = vcombine.low %v722, %v726
        %v729 = vmul.f32 %v711, %v727
        %s730 = scalar_lea.vmem %s346, 40 [#allocation7]
        %731 = vst [vmem:[%s730] sm:$0xff] %v729
        %s732 = scalar_lea.vmem %s304, 40 [#allocation5]
        %v733 = vld [vmem:[%s732] sm:$0xff]
        %s734 = scalar_lea.vmem %s369, 40
        %v735 = vld [vmem:[%s734] sm:$0x77]
        %v737 = vlaneseq
        %v738 = vshrl.u32 %v737, 7
        %v739 = vsub.s32 2, %v738
        %v740 = vrot.slane %v735, %v739
        %v741 = vlaneseq
        %v742 = vshrl.u32 %v741, 7
        %v743 = vsub.s32 6, %v742
        %v744 = vrot.slane %v735, %v743
        %v747 = vlaneseq
        %v748 = vshrl.u32 %v747, 7
        %v749 = vsub.s32 2, %v748
        %v750 = vrot.slane %v740, %v749
        %v751 = vlaneseq
        %v752 = vshrl.u32 %v751, 7
        %v753 = vsub.s32 2, %v752
        %v754 = vrot.slane %v744, %v753
        %v757 = vcombine.low %v750, %v754
        %v759 = vmul.f32 %v733, %v757
        %v760 = vadd.f32 %v759, %v735
        %v761 = vmul.f32 %v733, 1.442695
        %v762 = vpow.pop %v761
        %v763 = vrot.slane %v757, 6
        %v765 = vmul.f32 %v762, %v763
        %s766 = scalar_lea.vmem %s353, 40 [#allocation8]
        %767 = vst [vmem:[%s766] sm:$0x33] %v760
        %768 = vst [vmem:[%s766] sm:$0xcc] %v765
        %s769 = scalar_lea.vmem %s295, 48 [#allocation2]
        %v770 = vld [vmem:[%s769] sm:$0xff]
        %s771 = scalar_lea.vmem %s363, 12
        %v772 = vld [vmem:[%s771] sm:$0x3]
        %v773 = vxor.u32 %v770, 2147483648
        %v774 = vmul.f32 %v773, 1.442695
        %v775 = vpow.pop %v774
        %v776 = vadd.f32 %v775, 1.0
        %v777 = vrcp.pop %v776
        %v778 = vmul.f32 1.0, %v777
        %v779 = vxor.u32 %v772, 2147483648
        %v780 = vmul.f32 %v779, 1.442695
        %v781 = vpow.pop %v780
        %v782 = vadd.f32 %v781, 1.0
        %v783 = vrcp.pop %v782
        %v784 = vmul.f32 1.0, %v783
        %v786 = vlaneseq
        %v787 = vshrl.u32 %v786, 7
        %v788 = vsub.s32 0, %v787
        %v789 = vrot.slane %v784, %v788
        %v790 = vlaneseq
        %v791 = vshrl.u32 %v790, 7
        %v792 = vsub.s32 1, %v791
        %v793 = vrot.slane %v784, %v792
        %v794 = vcombine.low %v789, %v793
        %v796 = vmul.f32 %v778, %v794
        %s797 = scalar_lea.vmem %s346, 48 [#allocation7]
        %798 = vst [vmem:[%s797] sm:$0xff] %v796
        %s799 = scalar_lea.vmem %s304, 48 [#allocation5]
        %v800 = vld [vmem:[%s799] sm:$0xff]
        %s801 = scalar_lea.vmem %s369, 48
        %v802 = vld [vmem:[%s801] sm:$0x77]
        %v804 = vlaneseq
        %v805 = vshrl.u32 %v804, 7
        %v806 = vsub.s32 2, %v805
        %v807 = vrot.slane %v802, %v806
        %v808 = vlaneseq
        %v809 = vshrl.u32 %v808, 7
        %v810 = vsub.s32 6, %v809
        %v811 = vrot.slane %v802, %v810
        %v814 = vlaneseq
        %v815 = vshrl.u32 %v814, 7
        %v816 = vsub.s32 2, %v815
        %v817 = vrot.slane %v807, %v816
        %v818 = vlaneseq
        %v819 = vshrl.u32 %v818, 7
        %v820 = vsub.s32 2, %v819
        %v821 = vrot.slane %v811, %v820
        %v824 = vcombine.low %v817, %v821
        %v826 = vmul.f32 %v800, %v824
        %v827 = vadd.f32 %v826, %v802
        %v828 = vmul.f32 %v800, 1.442695
        %v829 = vpow.pop %v828
        %v830 = vrot.slane %v824, 6
        %v832 = vmul.f32 %v829, %v830
        %s833 = scalar_lea.vmem %s353, 48 [#allocation8]
        %834 = vst [vmem:[%s833] sm:$0x33] %v827
        %835 = vst [vmem:[%s833] sm:$0xcc] %v832
        %s836 = scalar_lea.vmem %s295, 56 [#allocation2]
        %v837 = vld [vmem:[%s836] sm:$0xff]
        %s838 = scalar_lea.vmem %s363, 14
        %v839 = vld [vmem:[%s838] sm:$0x3]
        %v840 = vxor.u32 %v837, 2147483648
        %v841 = vmul.f32 %v840, 1.442695
        %v842 = vpow.pop %v841
        %v843 = vadd.f32 %v842, 1.0
        %v844 = vrcp.pop %v843
        %v845 = vmul.f32 1.0, %v844
        %v846 = vxor.u32 %v839, 2147483648
        %v847 = vmul.f32 %v846, 1.442695
        %v848 = vpow.pop %v847
        %v849 = vadd.f32 %v848, 1.0
        %v850 = vrcp.pop %v849
        %v851 = vmul.f32 1.0, %v850
        %v853 = vlaneseq
        %v854 = vshrl.u32 %v853, 7
        %v855 = vsub.s32 0, %v854
        %v856 = vrot.slane %v851, %v855
        %v857 = vlaneseq
        %v858 = vshrl.u32 %v857, 7
        %v859 = vsub.s32 1, %v858
        %v860 = vrot.slane %v851, %v859
        %v861 = vcombine.low %v856, %v860
        %v863 = vmul.f32 %v845, %v861
        %s864 = scalar_lea.vmem %s346, 56 [#allocation7]
        %865 = vst [vmem:[%s864] sm:$0xff] %v863
        %s866 = scalar_lea.vmem %s304, 56 [#allocation5]
        %v867 = vld [vmem:[%s866] sm:$0xff]
        %s868 = scalar_lea.vmem %s369, 56
        %v869 = vld [vmem:[%s868] sm:$0x77]
        %v871 = vlaneseq
        %v872 = vshrl.u32 %v871, 7
        %v873 = vsub.s32 2, %v872
        %v874 = vrot.slane %v869, %v873
        %v875 = vlaneseq
        %v876 = vshrl.u32 %v875, 7
        %v877 = vsub.s32 6, %v876
        %v878 = vrot.slane %v869, %v877
        %v881 = vlaneseq
        %v882 = vshrl.u32 %v881, 7
        %v883 = vsub.s32 2, %v882
        %v884 = vrot.slane %v874, %v883
        %v885 = vlaneseq
        %v886 = vshrl.u32 %v885, 7
        %v887 = vsub.s32 2, %v886
        %v888 = vrot.slane %v878, %v887
        %v891 = vcombine.low %v884, %v888
        %v893 = vmul.f32 %v867, %v891
        %v894 = vadd.f32 %v893, %v869
        %v895 = vmul.f32 %v867, 1.442695
        %v896 = vpow.pop %v895
        %v897 = vrot.slane %v891, 6
        %v899 = vmul.f32 %v896, %v897
        %s900 = scalar_lea.vmem %s353, 56 [#allocation8]
        %901 = vst [vmem:[%s900] sm:$0x33] %v894
        %902 = vst [vmem:[%s900] sm:$0xcc] %v899
        %s903 = scalar_lea.vmem %s295, 64 [#allocation2]
        %v904 = vld [vmem:[%s903] sm:$0xff]
        %s905 = scalar_lea.vmem %s363, 16
        %v906 = vld [vmem:[%s905] sm:$0x3]
        %v907 = vxor.u32 %v904, 2147483648
        %v908 = vmul.f32 %v907, 1.442695
        %v909 = vpow.pop %v908
        %v910 = vadd.f32 %v909, 1.0
        %v911 = vrcp.pop %v910
        %v912 = vmul.f32 1.0, %v911
        %v913 = vxor.u32 %v906, 2147483648
        %v914 = vmul.f32 %v913, 1.442695
        %v915 = vpow.pop %v914
        %v916 = vadd.f32 %v915, 1.0
        %v917 = vrcp.pop %v916
        %v918 = vmul.f32 1.0, %v917
        %v920 = vlaneseq
        %v921 = vshrl.u32 %v920, 7
        %v922 = vsub.s32 0, %v921
        %v923 = vrot.slane %v918, %v922
        %v924 = vlaneseq
        %v925 = vshrl.u32 %v924, 7
        %v926 = vsub.s32 1, %v925
        %v927 = vrot.slane %v918, %v926
        %v928 = vcombine.low %v923, %v927
        %v930 = vmul.f32 %v912, %v928
        %s931 = scalar_lea.vmem %s346, 64 [#allocation7]
        %932 = vst [vmem:[%s931] sm:$0xff] %v930
        %s933 = scalar_lea.vmem %s304, 64 [#allocation5]
        %v934 = vld [vmem:[%s933] sm:$0xff]
        %s935 = scalar_lea.vmem %s369, 64
        %v936 = vld [vmem:[%s935] sm:$0x77]
        %v938 = vlaneseq
        %v939 = vshrl.u32 %v938, 7
        %v940 = vsub.s32 2, %v939
        %v941 = vrot.slane %v936, %v940
        %v942 = vlaneseq
        %v943 = vshrl.u32 %v942, 7
        %v944 = vsub.s32 6, %v943
        %v945 = vrot.slane %v936, %v944
        %v948 = vlaneseq
        %v949 = vshrl.u32 %v948, 7
        %v950 = vsub.s32 2, %v949
        %v951 = vrot.slane %v941, %v950
        %v952 = vlaneseq
        %v953 = vshrl.u32 %v952, 7
        %v954 = vsub.s32 2, %v953
        %v955 = vrot.slane %v945, %v954
        %v958 = vcombine.low %v951, %v955
        %v960 = vmul.f32 %v934, %v958
        %v961 = vadd.f32 %v960, %v936
        %v962 = vmul.f32 %v934, 1.442695
        %v963 = vpow.pop %v962
        %v964 = vrot.slane %v958, 6
        %v966 = vmul.f32 %v963, %v964
        %s967 = scalar_lea.vmem %s353, 64 [#allocation8]
        %968 = vst [vmem:[%s967] sm:$0x33] %v961
        %969 = vst [vmem:[%s967] sm:$0xcc] %v966
        %s970 = sand.u32 %s161, 1
        %s971 = scalar_lea.sflag [#allocation4], %s970
        %s972 = sand.u32 %s161, 1
        %s973 = smul.addr %s972, 72
        %s974 = scalar_lea.vmem [#allocation7], %s973
        %s975 = sand.u32 %s189, 1
        %s976 = scalar_lea.sflag [#allocation9], %s975
        %s977 = sand.u32 %s189, 1
        %s978 = smul.addr %s977, 72
        %s979 = scalar_lea.vmem [#allocation8], %s978
        // Predicated region
        $region45: #{tpu_custom_call.1} parent=35 // pred_check
          %p980 = pneg %p171
        $region46: #{tpu_custom_call.1} parent=35 // pred_check_branch
          %982 = sbr.rel (%p980) target = $region48
        $region47: #{tpu_custom_call.1} parent=35 // pred_region
          %s983 = smul.u32 18, %s34
          %s985 = ssub.s32 1152, 1152
          %986 = vsyncadd %s971, %s985
          %s987 = smul.addr %s33, 18
          %s988 = sadd.s32 %s983, %s987
          %s989 = smul.addr %s988, 64
          %s990 = scalar_lea.hbm %s4, %s989
          %s992 = sshll.u32 %s974, 4
          %s993 = int_to_ptr.vmem [resolvable:$true] %s992
          %995 = dma.vmem_to_hbm [thread:$0]  %s993, 1152, %s990, %s971
        $region48: #{tpu_custom_call.1} parent=35 // pred_fallthru
          _
        // Predicated region
        $region49: #{tpu_custom_call.1} parent=35 // pred_check
          %p996 = pneg %p199
        $region50: #{tpu_custom_call.1} parent=35 // pred_check_branch
          %998 = sbr.rel (%p996) target = $region52
        $region51: #{tpu_custom_call.1} parent=35 // pred_region
          %s999 = smul.u32 18, %s34
          %s1001 = ssub.s32 1152, 1152
          %1002 = vsyncadd %s976, %s1001
          %s1003 = smul.addr %s33, 18
          %s1004 = sadd.s32 %s999, %s1003
          %s1005 = smul.addr %s1004, 64
          %s1006 = scalar_lea.hbm %s5, %s1005
          %s1008 = sshll.u32 %s979, 4
          %s1009 = int_to_ptr.vmem [resolvable:$true] %s1008
          %1011 = dma.vmem_to_hbm [thread:$0]  %s1009, 1152, %s1006, %s976
        $region52: #{tpu_custom_call.1} parent=35 // pred_fallthru
          _
      $region36: #{tpu_custom_call.1} parent=5 // pred_fallthru
        _
      %p1012 = scmp.le.s32.totalorder 2, %s24
      // Predicated region
      $region53: #{tpu_custom_call.1} parent=5 // pred_check
        %p1013 = pneg %p1012
      $region54: #{tpu_custom_call.1} parent=5 // pred_check_branch
        %1015 = sbr.rel (%p1013) target = $region56
      $region55: #{tpu_custom_call.1} parent=5 // pred_region
        %s1016 = ssub.s32 %s24, 2
        // Predicated region
        $region57: #{tpu_custom_call.1} parent=55 // pred_check
          %p1017 = pneg %p177
        $region58: #{tpu_custom_call.1} parent=55 // pred_check_branch
          %1019 = sbr.rel (%p1017) target = $region60
        $region59: #{tpu_custom_call.1} parent=55 // pred_region
          %s1020 = sand.u32 %s162, 1
          %s1021 = scalar_lea.sflag [#allocation4], %s1020
          %s1022 = sand.u32 %s162, 1
          %s1023 = smul.addr %s1022, 72
          %s1024 = scalar_lea.vmem [#allocation7], %s1023
          %1025 = dma.done %s1021, 1152
        $region60: #{tpu_custom_call.1} parent=55 // pred_fallthru
          _
        // Predicated region
        $region61: #{tpu_custom_call.1} parent=55 // pred_check
          %p1026 = pneg %p205
        $region62: #{tpu_custom_call.1} parent=55 // pred_check_branch
          %1028 = sbr.rel (%p1026) target = $region64
        $region63: #{tpu_custom_call.1} parent=55 // pred_region
          %s1029 = sand.u32 %s190, 1
          %s1030 = scalar_lea.sflag [#allocation9], %s1029
          %s1031 = sand.u32 %s190, 1
          %s1032 = smul.addr %s1031, 72
          %s1033 = scalar_lea.vmem [#allocation8], %s1032
          %1034 = dma.done %s1030, 1152
        $region64: #{tpu_custom_call.1} parent=55 // pred_fallthru
          _
      $region56: #{tpu_custom_call.1} parent=5 // pred_fallthru
        _
    $region6: #{tpu_custom_call.1} parent=1 // loop_footer
      %s28 = sadd.s32 1, %s24
    $region7: #{tpu_custom_call.1} parent=1 // loop_footer_branch
      %23 = sbr.rel target = $region3
    $region8: #{tpu_custom_call.1} parent=1 // loop_exit
      _
    %1035 = vsyncpa [#allocation3], 1
    %s1036 = scalar_lea.sflag [#allocation3], 1
    %1037 = vsyncpa %s1036, 1
    %1038 = vsyncpa [#allocation6], 1
    %s1039 = scalar_lea.sflag [#allocation6], 1
    %1040 = vsyncpa %s1039, 1
    %1041 = vsyncpa [#allocation4], 1
    %s1042 = scalar_lea.sflag [#allocation4], 1
    %1043 = vsyncpa %s1042, 1
    %1044 = vsyncpa [#allocation9], 1
    %s1045 = scalar_lea.sflag [#allocation9], 1
    %1046 = vsyncpa %s1045, 1

</llo_original>
